<compile_context>
chip_gen: v7x
topology: tpu7x:2x2x1
jax: 0.10.0
libtpu: 0.0.40
codegen_flags: <defaults>
</compile_context>

<pallas_src>
import jax
import jax.numpy as jnp
from jax.experimental import pallas as pl
from jax.experimental.pallas import tpu as pltpu

EPS = 1e-5


def pesa_block_kernel(x_ref, w1sc_ref, b1sc_ref,
                      g1_ref, be1_ref,
                      wc_ref, bc_ref, g0_ref, be0_ref,
                      wf1_ref, bf1_ref, gs_ref, bes_ref,
                      wf2_ref, bf2_ref,
                      w3_ref, b3_ref, g3_ref, be3_ref,
                      out_ref):
    # layout: x_ref (B, Cin, S); conv weights (Cout, Cin); conv biases / norm
    # gammas / betas (C, 1); fc weights (Cin, Cout); fc vectors (1, C);
    # out_ref (B, 2*planes, S).
    B, cin, S = x_ref.shape
    gw = g1_ref.shape[0]
    cout = g3_ref.shape[0]

    x = x_ref[...]  # (B, cin, S)

    def conv1x1(v, w, b):
        # v: (B, Ci, S), w: (Co, Ci), b: (Co, 1) -> (B, Co, S).  Per-b 2-D MXU
        # matmuls with S (the only large axis) lane-dense on the output.
        return jnp.stack(
            [jnp.dot(w, v[i], preferred_element_type=jnp.float32) + b
             for i in range(v.shape[0])],
            axis=0)

    def in_bn(v, gamma, beta, relu):
        # Fused InstanceNorm2d(affine=False) -> BatchNorm2d(training batch stats)
        # [-> ReLU]: one stats pass over v, one combined scale/bias pass.
        mu = jnp.mean(v, axis=2, keepdims=True)                         # (B, C, 1)
        var = jnp.mean((v - mu) * (v - mu), axis=2, keepdims=True)      # (B, C, 1)
        inv_in = jax.lax.rsqrt(var + EPS)                               # (B, C, 1)
        # IN output has exactly zero per-(b,c) mean => BN mean = 0 and
        # BN var_c = mean_b[ var_bc / (var_bc + eps) ].
        bn_var = jnp.mean(var * inv_in * inv_in, axis=0, keepdims=True)  # (1, C, 1)
        scale = gamma * jax.lax.rsqrt(bn_var + EPS) * inv_in            # (B, C, 1)
        o = (v - mu) * scale + beta
        return jnp.maximum(o, 0.0) if relu else o

    # conv1 (1x1) + shortcut conv fused into a single matmul over the shared input x.
    hr = conv1x1(x, w1sc_ref[...], b1sc_ref[...])                       # (B, gw+cout, S)
    h = in_bn(hr[:, :gw, :], g1_ref[...], be1_ref[...], relu=True)      # (B, gw, S)
    res = hr[:, gw:, :]                                                 # (B, cout, S)

    # SSEU (radix=1): conv(1x1) -> IN -> BN -> ReLU -> GAP -> fc1 -> BN -> ReLU
    #                 -> fc2 -> sigmoid -> channel-wise rescale of the feature map.
    y = conv1x1(h, wc_ref[...], bc_ref[...])
    y = in_bn(y, g0_ref[...], be0_ref[...], relu=True)                  # (B, gw, S)
    gap = jnp.mean(y, axis=2)                                           # (B, gw)
    gap = jnp.dot(gap, wf1_ref[...], preferred_element_type=jnp.float32) + bf1_ref[...]
    # BatchNorm over the batch axis only (spatial already pooled to 1x1).
    gmu = jnp.mean(gap, axis=0, keepdims=True)
    gvar = jnp.mean((gap - gmu) * (gap - gmu), axis=0, keepdims=True)
    gap = jnp.maximum(
        (gap - gmu) * jax.lax.rsqrt(gvar + EPS) * gs_ref[...] + bes_ref[...], 0.0)
    atten = jax.nn.sigmoid(
        jnp.dot(gap, wf2_ref[...], preferred_element_type=jnp.float32) + bf2_ref[...])
    y = atten[:, :, None] * y                                           # (B, gw, S)

    # conv3 (1x1) -> IN -> BN, residual add, ReLU.
    z = conv1x1(y, w3_ref[...], b3_ref[...])
    z = in_bn(z, g3_ref[...], be3_ref[...], relu=False)                 # (B, cout, S)
    out_ref[...] = jnp.maximum(z + res, 0.0)


def pesa_block_pallas(x_nchw, params):
    """x_nchw: (B, inplanes, H, W) float32 (PyTorch NCHW).  Returns (B, 2*planes, H, W)."""
    (w1, b1, g1, be1, wc, bc, g0, be0, wf1, bf1, gs, bes, wf2, bf2,
     w3, b3, g3, be3, wsc, bsc) = params
    B, cin, H, W = x_nchw.shape
    S = H * W
    gw = w1.shape[0]
    cout = w3.shape[0]

    # NCHW -> (B, C, S) is a pure reshape of the contiguous tensor: spatial ends up
    # on the lane axis, channels on sublanes, and no transpose/copy is needed.
    x = x_nchw.reshape(B, cin, S)

    # Fuse conv1 + shortcut (same LHS) into a single weight/bias.
    w1sc = jnp.concatenate([w1, wsc], axis=0)   # (gw + cout, cin)
    b1sc = jnp.concatenate([b1, bsc], axis=0)   # (gw + cout, 1)

    args = (x, w1sc, b1sc, g1, be1, wc, bc, g0, be0,
            wf1, bf1, gs, bes, wf2, bf2, w3, b3, g3, be3)

    # Rough f32 working-set budget: x, fused conv1/shortcut output, h, y, z, out.
    work_bytes = 4 * B * S * (cin + (gw + cout) + 3 * gw + 2 * cout)
    vmem_limit = int(min(max(2 * work_bytes, 16 * 2 ** 20), 48 * 2 ** 20))

    out = pl.pallas_call(
        pesa_block_kernel,
        out_shape=jax.ShapeDtypeStruct((B, cout, S), jnp.float32),
        compiler_params=pltpu.CompilerParams(vmem_limit_bytes=vmem_limit),
    )(*args)
    return out.reshape(B, cout, H, W)


def pesa_block_ref(x_nchw, params):
    """Pure-JAX reference implementing the *unfused* original math (IN then BN)."""
    (w1, b1, g1, be1, wc, bc, g0, be0, wf1, bf1, gs, bes, wf2, bf2,
     w3, b3, g3, be3, wsc, bsc) = params
    B, cin, H, W = x_nchw.shape
    S = H * W
    cout = w3.shape[0]
    x = x_nchw.reshape(B, cin, S)

    def conv1x1(v, w, b):
        return jnp.einsum('oc,bcs->bos', w, v) + b

    def inorm(v):
        mu = jnp.mean(v, axis=2, keepdims=True)
        var = jnp.mean((v - mu) ** 2, axis=2, keepdims=True)
        return (v - mu) * jax.lax.rsqrt(var + EPS)

    def bnorm(v, gamma, beta):
        mu = jnp.mean(v, axis=(0, 2), keepdims=True)
        var = jnp.mean((v - mu) ** 2, axis=(0, 2), keepdims=True)
        return (v - mu) * jax.lax.rsqrt(var + EPS) * gamma + beta

    h = jnp.maximum(bnorm(inorm(conv1x1(x, w1, b1)), g1, be1), 0.0)
    y = jnp.maximum(bnorm(inorm(conv1x1(h, wc, bc)), g0, be0), 0.0)
    gap = jnp.mean(y, axis=2)
    gap = gap @ wf1 + bf1
    gmu = jnp.mean(gap, axis=0, keepdims=True)
    gvar = jnp.mean((gap - gmu) ** 2, axis=0, keepdims=True)
    gap = jnp.maximum((gap - gmu) * jax.lax.rsqrt(gvar + EPS) * gs + bes, 0.0)
    atten = jax.nn.sigmoid(gap @ wf2 + bf2)
    y = atten[:, :, None] * y
    z = bnorm(inorm(conv1x1(y, w3, b3)), g3, be3)
    res = conv1x1(x, wsc, bsc)
    return jnp.maximum(z + res, 0.0).reshape(B, cout, H, W)


if __name__ == "__main__":
    # PESA_Block(inplanes=8, planes=16, radix=1) -> group_width = 16, out = 32 channels.
    # H = W = 16 so S = 256 (lane-dense: multiple of 128); channels are multiples of 8.
    B, inplanes, H, W = 2, 8, 16, 16
    planes = 16
    radix = 1
    gw = planes                                   # group_width (bottleneck_width=64)
    inter = max(gw * radix // 4, 32)              # SSEU inter_channels = 32
    cout = planes * 2                             # shot_cut present (32 != 8)

    key = jax.random.PRNGKey(0)
    ks = jax.random.split(key, 24)

    def w(k, shape, scale=0.1):
        return (scale * jax.random.normal(k, shape)).astype(jnp.float32)

    params = (
        w(ks[0], (gw, inplanes)), w(ks[1], (gw, 1)),            # conv1 weight (Cout,Cin) / bias
        1.0 + w(ks[2], (gw, 1)), w(ks[3], (gw, 1)),             # bn1 gamma / beta
        w(ks[4], (gw, gw)), w(ks[5], (gw, 1)),                  # SSEU.conv weight / bias
        1.0 + w(ks[6], (gw, 1)), w(ks[7], (gw, 1)),             # SSEU.bn0 gamma / beta
        w(ks[8], (gw, inter)), w(ks[9], (1, inter)),            # SSEU.fc1 weight (Cin,Cout) / bias
        1.0 + w(ks[10], (1, inter)), w(ks[11], (1, inter)),     # SSEU.bn1 gamma / beta
        w(ks[12], (inter, gw)), w(ks[13], (1, gw)),             # SSEU.fc2 weight / bias
        w(ks[14], (cout, gw)), w(ks[15], (cout, 1)),            # conv3 weight / bias
        1.0 + w(ks[16], (cout, 1)), w(ks[17], (cout, 1)),       # bn3 gamma / beta
        w(ks[18], (cout, inplanes)), w(ks[19], (cout, 1)),      # shot_cut weight / bias
    )
    x = jax.random.normal(ks[20], (B, inplanes, H, W), dtype=jnp.float32)

    out = jax.block_until_ready(pesa_block_pallas(x, params))
    ref = pesa_block_ref(x, params)

    assert out.shape == (B, cout, H, W), out.shape
    err = float(jnp.max(jnp.abs(out - ref)))
    assert jnp.allclose(out, ref, atol=2e-3, rtol=2e-3), err
    print("KERNEL_OK")
</pallas_src>

<mosaic_0001>
module attributes {stable_mosaic.version = 11 : i64} {
  func.func @pesa_block_kernel(%arg0: memref<2x8x256xf32, #tpu.memory_space<vmem>>, %arg1: memref<48x8xf32, #tpu.memory_space<vmem>>, %arg2: memref<48x1xf32, #tpu.memory_space<vmem>>, %arg3: memref<16x1xf32, #tpu.memory_space<vmem>>, %arg4: memref<16x1xf32, #tpu.memory_space<vmem>>, %arg5: memref<16x16xf32, #tpu.memory_space<vmem>>, %arg6: memref<16x1xf32, #tpu.memory_space<vmem>>, %arg7: memref<16x1xf32, #tpu.memory_space<vmem>>, %arg8: memref<16x1xf32, #tpu.memory_space<vmem>>, %arg9: memref<16x32xf32, #tpu.memory_space<vmem>>, %arg10: memref<1x32xf32, #tpu.memory_space<vmem>>, %arg11: memref<1x32xf32, #tpu.memory_space<vmem>>, %arg12: memref<1x32xf32, #tpu.memory_space<vmem>>, %arg13: memref<32x16xf32, #tpu.memory_space<vmem>>, %arg14: memref<1x16xf32, #tpu.memory_space<vmem>>, %arg15: memref<32x16xf32, #tpu.memory_space<vmem>>, %arg16: memref<32x1xf32, #tpu.memory_space<vmem>>, %arg17: memref<32x1xf32, #tpu.memory_space<vmem>>, %arg18: memref<32x1xf32, #tpu.memory_space<vmem>>, %arg19: memref<2x32x256xf32, #tpu.memory_space<vmem>>) attributes {dimension_semantics = [], scalar_prefetch = 0 : i64, scratch_operands = 0 : i64, tpu.core_type = #tpu.core_type<tc>} {
    %c0 = arith.constant 0 : index
    %c0_0 = arith.constant 0 : index
    %c0_1 = arith.constant 0 : index
    %0 = vector.load %arg0[%c0, %c0_0, %c0_1] : memref<2x8x256xf32, #tpu.memory_space<vmem>>, vector<2x8x256xf32>
    %c0_2 = arith.constant 0 : index
    %c0_3 = arith.constant 0 : index
    %1 = vector.load %arg1[%c0_2, %c0_3] : memref<48x8xf32, #tpu.memory_space<vmem>>, vector<48x8xf32>
    %c0_4 = arith.constant 0 : index
    %c0_5 = arith.constant 0 : index
    %2 = vector.load %arg2[%c0_4, %c0_5] : memref<48x1xf32, #tpu.memory_space<vmem>>, vector<48x1xf32>
    %3 = vector.extract_strided_slice %0 {offsets = [0, 0, 0], sizes = [1, 8, 256], strides = [1, 1, 1]} : vector<2x8x256xf32> to vector<1x8x256xf32>
    %4 = vector.shape_cast %3 : vector<1x8x256xf32> to vector<8x256xf32>
    %cst = arith.constant dense<0.000000e+00> : vector<48x256xf32>
    %5 = tpu.matmul %1, %4, %cst {dimension_numbers = #tpu.dot_dimension_numbers<[1], [0], [0], [1], [0, 0, 1, 1], [], []>} : vector<48x8xf32>, vector<8x256xf32>, vector<48x256xf32> -> vector<48x256xf32>
    %6 = vector.broadcast %2 : vector<48x1xf32> to vector<48x256xf32>
    %7 = arith.addf %5, %6 : vector<48x256xf32>
    %8 = vector.extract_strided_slice %0 {offsets = [1, 0, 0], sizes = [1, 8, 256], strides = [1, 1, 1]} : vector<2x8x256xf32> to vector<1x8x256xf32>
    %9 = vector.shape_cast %8 : vector<1x8x256xf32> to vector<8x256xf32>
    %cst_6 = arith.constant dense<0.000000e+00> : vector<48x256xf32>
    %10 = tpu.matmul %1, %9, %cst_6 {dimension_numbers = #tpu.dot_dimension_numbers<[1], [0], [0], [1], [0, 0, 1, 1], [], []>} : vector<48x8xf32>, vector<8x256xf32>, vector<48x256xf32> -> vector<48x256xf32>
    %11 = vector.broadcast %2 : vector<48x1xf32> to vector<48x256xf32>
    %12 = arith.addf %10, %11 : vector<48x256xf32>
    %13 = vector.shape_cast %7 : vector<48x256xf32> to vector<1x48x256xf32>
    %14 = vector.shape_cast %12 : vector<48x256xf32> to vector<1x48x256xf32>
    %15 = tpu.concatenate %13, %14 in 0 : vector<1x48x256xf32>, vector<1x48x256xf32> -> vector<2x48x256xf32>
    %16 = vector.extract_strided_slice %15 {offsets = [0, 0, 0], sizes = [2, 16, 256], strides = [1, 1, 1]} : vector<2x48x256xf32> to vector<2x16x256xf32>
    %c0_7 = arith.constant 0 : index
    %c0_8 = arith.constant 0 : index
    %17 = vector.load %arg3[%c0_7, %c0_8] : memref<16x1xf32, #tpu.memory_space<vmem>>, vector<16x1xf32>
    %c0_9 = arith.constant 0 : index
    %c0_10 = arith.constant 0 : index
    %18 = vector.load %arg4[%c0_9, %c0_10] : memref<16x1xf32, #tpu.memory_space<vmem>>, vector<16x1xf32>
    %cst_11 = arith.constant dense<0.000000e+00> : vector<2x16xf32>
    %19 = vector.multi_reduction <add>, %16, %cst_11 [2] : vector<2x16x256xf32> to vector<2x16xf32>
    %20 = vector.shape_cast %19 : vector<2x16xf32> to vector<2x16x1xf32>
    %cst_12 = arith.constant 2.560000e+02 : f32
    %21 = vector.broadcast %cst_12 : f32 to vector<2x16x1xf32>
    %22 = arith.divf %20, %21 : vector<2x16x1xf32>
    %23 = vector.broadcast %22 : vector<2x16x1xf32> to vector<2x16x256xf32>
    %24 = arith.subf %16, %23 : vector<2x16x256xf32>
    %25 = vector.broadcast %22 : vector<2x16x1xf32> to vector<2x16x256xf32>
    %26 = arith.subf %16, %25 : vector<2x16x256xf32>
    %27 = arith.mulf %24, %26 : vector<2x16x256xf32>
    %cst_13 = arith.constant dense<0.000000e+00> : vector<2x16xf32>
    %28 = vector.multi_reduction <add>, %27, %cst_13 [2] : vector<2x16x256xf32> to vector<2x16xf32>
    %29 = vector.shape_cast %28 : vector<2x16xf32> to vector<2x16x1xf32>
    %cst_14 = arith.constant 2.560000e+02 : f32
    %30 = vector.broadcast %cst_14 : f32 to vector<2x16x1xf32>
    %31 = arith.divf %29, %30 : vector<2x16x1xf32>
    %cst_15 = arith.constant 9.99999974E-6 : f32
    %32 = vector.broadcast %cst_15 : f32 to vector<2x16x1xf32>
    %33 = arith.addf %31, %32 : vector<2x16x1xf32>
    %34 = math.rsqrt %33 : vector<2x16x1xf32>
    %35 = arith.mulf %31, %34 : vector<2x16x1xf32>
    %36 = arith.mulf %35, %34 : vector<2x16x1xf32>
    %cst_16 = arith.constant dense<0.000000e+00> : vector<16x1xf32>
    %37 = vector.multi_reduction <add>, %36, %cst_16 [0] : vector<2x16x1xf32> to vector<16x1xf32>
    %38 = vector.shape_cast %37 : vector<16x1xf32> to vector<1x16x1xf32>
    %cst_17 = arith.constant 2.000000e+00 : f32
    %39 = vector.broadcast %cst_17 : f32 to vector<1x16x1xf32>
    %40 = arith.divf %38, %39 : vector<1x16x1xf32>
    %cst_18 = arith.constant 9.99999974E-6 : f32
    %41 = vector.broadcast %cst_18 : f32 to vector<1x16x1xf32>
    %42 = arith.addf %40, %41 : vector<1x16x1xf32>
    %43 = math.rsqrt %42 : vector<1x16x1xf32>
    %44 = vector.shape_cast %17 : vector<16x1xf32> to vector<1x16x1xf32>
    %45 = arith.mulf %44, %43 : vector<1x16x1xf32>
    %46 = vector.broadcast %45 : vector<1x16x1xf32> to vector<2x16x1xf32>
    %47 = arith.mulf %46, %34 : vector<2x16x1xf32>
    %48 = vector.broadcast %22 : vector<2x16x1xf32> to vector<2x16x256xf32>
    %49 = arith.subf %16, %48 : vector<2x16x256xf32>
    %50 = vector.broadcast %47 : vector<2x16x1xf32> to vector<2x16x256xf32>
    %51 = arith.mulf %49, %50 : vector<2x16x256xf32>
    %52 = vector.shape_cast %18 : vector<16x1xf32> to vector<1x16x1xf32>
    %53 = vector.broadcast %52 : vector<1x16x1xf32> to vector<2x16x256xf32>
    %54 = arith.addf %51, %53 : vector<2x16x256xf32>
    %cst_19 = arith.constant 0.000000e+00 : f32
    %55 = vector.broadcast %cst_19 : f32 to vector<2x16x256xf32>
    %56 = arith.maximumf %54, %55 : vector<2x16x256xf32>
    %57 = vector.extract_strided_slice %15 {offsets = [0, 16, 0], sizes = [2, 32, 256], strides = [1, 1, 1]} : vector<2x48x256xf32> to vector<2x32x256xf32>
    %c0_20 = arith.constant 0 : index
    %c0_21 = arith.constant 0 : index
    %58 = vector.load %arg5[%c0_20, %c0_21] : memref<16x16xf32, #tpu.memory_space<vmem>>, vector<16x16xf32>
    %c0_22 = arith.constant 0 : index
    %c0_23 = arith.constant 0 : index
    %59 = vector.load %arg6[%c0_22, %c0_23] : memref<16x1xf32, #tpu.memory_space<vmem>>, vector<16x1xf32>
    %60 = vector.extract_strided_slice %56 {offsets = [0, 0, 0], sizes = [1, 16, 256], strides = [1, 1, 1]} : vector<2x16x256xf32> to vector<1x16x256xf32>
    %61 = vector.shape_cast %60 : vector<1x16x256xf32> to vector<16x256xf32>
    %cst_24 = arith.constant dense<0.000000e+00> : vector<16x256xf32>
    %62 = tpu.matmul %58, %61, %cst_24 {dimension_numbers = #tpu.dot_dimension_numbers<[1], [0], [0], [1], [0, 0, 1, 1], [], []>} : vector<16x16xf32>, vector<16x256xf32>, vector<16x256xf32> -> vector<16x256xf32>
    %63 = vector.broadcast %59 : vector<16x1xf32> to vector<16x256xf32>
    %64 = arith.addf %62, %63 : vector<16x256xf32>
    %65 = vector.extract_strided_slice %56 {offsets = [1, 0, 0], sizes = [1, 16, 256], strides = [1, 1, 1]} : vector<2x16x256xf32> to vector<1x16x256xf32>
    %66 = vector.shape_cast %65 : vector<1x16x256xf32> to vector<16x256xf32>
    %cst_25 = arith.constant dense<0.000000e+00> : vector<16x256xf32>
    %67 = tpu.matmul %58, %66, %cst_25 {dimension_numbers = #tpu.dot_dimension_numbers<[1], [0], [0], [1], [0, 0, 1, 1], [], []>} : vector<16x16xf32>, vector<16x256xf32>, vector<16x256xf32> -> vector<16x256xf32>
    %68 = vector.broadcast %59 : vector<16x1xf32> to vector<16x256xf32>
    %69 = arith.addf %67, %68 : vector<16x256xf32>
    %70 = vector.shape_cast %64 : vector<16x256xf32> to vector<1x16x256xf32>
    %71 = vector.shape_cast %69 : vector<16x256xf32> to vector<1x16x256xf32>
    %72 = tpu.concatenate %70, %71 in 0 : vector<1x16x256xf32>, vector<1x16x256xf32> -> vector<2x16x256xf32>
    %c0_26 = arith.constant 0 : index
    %c0_27 = arith.constant 0 : index
    %73 = vector.load %arg7[%c0_26, %c0_27] : memref<16x1xf32, #tpu.memory_space<vmem>>, vector<16x1xf32>
    %c0_28 = arith.constant 0 : index
    %c0_29 = arith.constant 0 : index
    %74 = vector.load %arg8[%c0_28, %c0_29] : memref<16x1xf32, #tpu.memory_space<vmem>>, vector<16x1xf32>
    %cst_30 = arith.constant dense<0.000000e+00> : vector<2x16xf32>
    %75 = vector.multi_reduction <add>, %72, %cst_30 [2] : vector<2x16x256xf32> to vector<2x16xf32>
    %76 = vector.shape_cast %75 : vector<2x16xf32> to vector<2x16x1xf32>
    %cst_31 = arith.constant 2.560000e+02 : f32
    %77 = vector.broadcast %cst_31 : f32 to vector<2x16x1xf32>
    %78 = arith.divf %76, %77 : vector<2x16x1xf32>
    %79 = vector.broadcast %78 : vector<2x16x1xf32> to vector<2x16x256xf32>
    %80 = arith.subf %72, %79 : vector<2x16x256xf32>
    %81 = vector.broadcast %78 : vector<2x16x1xf32> to vector<2x16x256xf32>
    %82 = arith.subf %72, %81 : vector<2x16x256xf32>
    %83 = arith.mulf %80, %82 : vector<2x16x256xf32>
    %cst_32 = arith.constant dense<0.000000e+00> : vector<2x16xf32>
    %84 = vector.multi_reduction <add>, %83, %cst_32 [2] : vector<2x16x256xf32> to vector<2x16xf32>
    %85 = vector.shape_cast %84 : vector<2x16xf32> to vector<2x16x1xf32>
    %cst_33 = arith.constant 2.560000e+02 : f32
    %86 = vector.broadcast %cst_33 : f32 to vector<2x16x1xf32>
    %87 = arith.divf %85, %86 : vector<2x16x1xf32>
    %cst_34 = arith.constant 9.99999974E-6 : f32
    %88 = vector.broadcast %cst_34 : f32 to vector<2x16x1xf32>
    %89 = arith.addf %87, %88 : vector<2x16x1xf32>
    %90 = math.rsqrt %89 : vector<2x16x1xf32>
    %91 = arith.mulf %87, %90 : vector<2x16x1xf32>
    %92 = arith.mulf %91, %90 : vector<2x16x1xf32>
    %cst_35 = arith.constant dense<0.000000e+00> : vector<16x1xf32>
    %93 = vector.multi_reduction <add>, %92, %cst_35 [0] : vector<2x16x1xf32> to vector<16x1xf32>
    %94 = vector.shape_cast %93 : vector<16x1xf32> to vector<1x16x1xf32>
    %cst_36 = arith.constant 2.000000e+00 : f32
    %95 = vector.broadcast %cst_36 : f32 to vector<1x16x1xf32>
    %96 = arith.divf %94, %95 : vector<1x16x1xf32>
    %cst_37 = arith.constant 9.99999974E-6 : f32
    %97 = vector.broadcast %cst_37 : f32 to vector<1x16x1xf32>
    %98 = arith.addf %96, %97 : vector<1x16x1xf32>
    %99 = math.rsqrt %98 : vector<1x16x1xf32>
    %100 = vector.shape_cast %73 : vector<16x1xf32> to vector<1x16x1xf32>
    %101 = arith.mulf %100, %99 : vector<1x16x1xf32>
    %102 = vector.broadcast %101 : vector<1x16x1xf32> to vector<2x16x1xf32>
    %103 = arith.mulf %102, %90 : vector<2x16x1xf32>
    %104 = vector.broadcast %78 : vector<2x16x1xf32> to vector<2x16x256xf32>
    %105 = arith.subf %72, %104 : vector<2x16x256xf32>
    %106 = vector.broadcast %103 : vector<2x16x1xf32> to vector<2x16x256xf32>
    %107 = arith.mulf %105, %106 : vector<2x16x256xf32>
    %108 = vector.shape_cast %74 : vector<16x1xf32> to vector<1x16x1xf32>
    %109 = vector.broadcast %108 : vector<1x16x1xf32> to vector<2x16x256xf32>
    %110 = arith.addf %107, %109 : vector<2x16x256xf32>
    %cst_38 = arith.constant 0.000000e+00 : f32
    %111 = vector.broadcast %cst_38 : f32 to vector<2x16x256xf32>
    %112 = arith.maximumf %110, %111 : vector<2x16x256xf32>
    %cst_39 = arith.constant dense<0.000000e+00> : vector<2x16xf32>
    %113 = vector.multi_reduction <add>, %112, %cst_39 [2] : vector<2x16x256xf32> to vector<2x16xf32>
    %cst_40 = arith.constant 2.560000e+02 : f32
    %114 = vector.broadcast %cst_40 : f32 to vector<2x16xf32>
    %115 = arith.divf %113, %114 : vector<2x16xf32>
    %c0_41 = arith.constant 0 : index
    %c0_42 = arith.constant 0 : index
    %116 = vector.load %arg9[%c0_41, %c0_42] : memref<16x32xf32, #tpu.memory_space<vmem>>, vector<16x32xf32>
    %cst_43 = arith.constant dense<0.000000e+00> : vector<2x32xf32>
    %117 = tpu.matmul %115, %116, %cst_43 {dimension_numbers = #tpu.dot_dimension_numbers<[1], [0], [0], [1], [0, 0, 1, 1], [], []>} : vector<2x16xf32>, vector<16x32xf32>, vector<2x32xf32> -> vector<2x32xf32>
    %c0_44 = arith.constant 0 : index
    %c0_45 = arith.constant 0 : index
    %118 = vector.load %arg10[%c0_44, %c0_45] : memref<1x32xf32, #tpu.memory_space<vmem>>, vector<1x32xf32>
    %119 = vector.broadcast %118 : vector<1x32xf32> to vector<2x32xf32>
    %120 = arith.addf %117, %119 : vector<2x32xf32>
    %cst_46 = arith.constant dense<0.000000e+00> : vector<32xf32>
    %121 = vector.multi_reduction <add>, %120, %cst_46 [0] : vector<2x32xf32> to vector<32xf32>
    %122 = vector.shape_cast %121 : vector<32xf32> to vector<1x32xf32>
    %cst_47 = arith.constant 2.000000e+00 : f32
    %123 = vector.broadcast %cst_47 : f32 to vector<1x32xf32>
    %124 = arith.divf %122, %123 : vector<1x32xf32>
    %125 = vector.broadcast %124 : vector<1x32xf32> to vector<2x32xf32>
    %126 = arith.subf %120, %125 : vector<2x32xf32>
    %127 = vector.broadcast %124 : vector<1x32xf32> to vector<2x32xf32>
    %128 = arith.subf %120, %127 : vector<2x32xf32>
    %129 = arith.mulf %126, %128 : vector<2x32xf32>
    %cst_48 = arith.constant dense<0.000000e+00> : vector<32xf32>
    %130 = vector.multi_reduction <add>, %129, %cst_48 [0] : vector<2x32xf32> to vector<32xf32>
    %131 = vector.shape_cast %130 : vector<32xf32> to vector<1x32xf32>
    %cst_49 = arith.constant 2.000000e+00 : f32
    %132 = vector.broadcast %cst_49 : f32 to vector<1x32xf32>
    %133 = arith.divf %131, %132 : vector<1x32xf32>
    %134 = vector.broadcast %124 : vector<1x32xf32> to vector<2x32xf32>
    %135 = arith.subf %120, %134 : vector<2x32xf32>
    %cst_50 = arith.constant 9.99999974E-6 : f32
    %136 = vector.broadcast %cst_50 : f32 to vector<1x32xf32>
    %137 = arith.addf %133, %136 : vector<1x32xf32>
    %138 = math.rsqrt %137 : vector<1x32xf32>
    %139 = vector.broadcast %138 : vector<1x32xf32> to vector<2x32xf32>
    %140 = arith.mulf %135, %139 : vector<2x32xf32>
    %c0_51 = arith.constant 0 : index
    %c0_52 = arith.constant 0 : index
    %141 = vector.load %arg11[%c0_51, %c0_52] : memref<1x32xf32, #tpu.memory_space<vmem>>, vector<1x32xf32>
    %142 = vector.broadcast %141 : vector<1x32xf32> to vector<2x32xf32>
    %143 = arith.mulf %140, %142 : vector<2x32xf32>
    %c0_53 = arith.constant 0 : index
    %c0_54 = arith.constant 0 : index
    %144 = vector.load %arg12[%c0_53, %c0_54] : memref<1x32xf32, #tpu.memory_space<vmem>>, vector<1x32xf32>
    %145 = vector.broadcast %144 : vector<1x32xf32> to vector<2x32xf32>
    %146 = arith.addf %143, %145 : vector<2x32xf32>
    %cst_55 = arith.constant 0.000000e+00 : f32
    %147 = vector.broadcast %cst_55 : f32 to vector<2x32xf32>
    %148 = arith.maximumf %146, %147 : vector<2x32xf32>
    %c0_56 = arith.constant 0 : index
    %c0_57 = arith.constant 0 : index
    %149 = vector.load %arg13[%c0_56, %c0_57] : memref<32x16xf32, #tpu.memory_space<vmem>>, vector<32x16xf32>
    %cst_58 = arith.constant dense<0.000000e+00> : vector<2x16xf32>
    %150 = tpu.matmul %148, %149, %cst_58 {dimension_numbers = #tpu.dot_dimension_numbers<[1], [0], [0], [1], [0, 0, 1, 1], [], []>} : vector<2x32xf32>, vector<32x16xf32>, vector<2x16xf32> -> vector<2x16xf32>
    %c0_59 = arith.constant 0 : index
    %c0_60 = arith.constant 0 : index
    %151 = vector.load %arg14[%c0_59, %c0_60] : memref<1x16xf32, #tpu.memory_space<vmem>>, vector<1x16xf32>
    %152 = vector.broadcast %151 : vector<1x16xf32> to vector<2x16xf32>
    %153 = arith.addf %150, %152 : vector<2x16xf32>
    %154 = arith.negf %153 : vector<2x16xf32>
    %155 = math.exp %154 : vector<2x16xf32>
    %cst_61 = arith.constant 1.000000e+00 : f32
    %156 = vector.broadcast %cst_61 : f32 to vector<2x16xf32>
    %157 = arith.addf %156, %155 : vector<2x16xf32>
    %158 = arith.divf %156, %157 : vector<2x16xf32>
    %159 = vector.shape_cast %158 : vector<2x16xf32> to vector<2x16x1xf32>
    %160 = vector.broadcast %159 : vector<2x16x1xf32> to vector<2x16x256xf32>
    %161 = arith.mulf %160, %112 : vector<2x16x256xf32>
    %c0_62 = arith.constant 0 : index
    %c0_63 = arith.constant 0 : index
    %162 = vector.load %arg15[%c0_62, %c0_63] : memref<32x16xf32, #tpu.memory_space<vmem>>, vector<32x16xf32>
    %c0_64 = arith.constant 0 : index
    %c0_65 = arith.constant 0 : index
    %163 = vector.load %arg16[%c0_64, %c0_65] : memref<32x1xf32, #tpu.memory_space<vmem>>, vector<32x1xf32>
    %164 = vector.extract_strided_slice %161 {offsets = [0, 0, 0], sizes = [1, 16, 256], strides = [1, 1, 1]} : vector<2x16x256xf32> to vector<1x16x256xf32>
    %165 = vector.shape_cast %164 : vector<1x16x256xf32> to vector<16x256xf32>
    %cst_66 = arith.constant dense<0.000000e+00> : vector<32x256xf32>
    %166 = tpu.matmul %162, %165, %cst_66 {dimension_numbers = #tpu.dot_dimension_numbers<[1], [0], [0], [1], [0, 0, 1, 1], [], []>} : vector<32x16xf32>, vector<16x256xf32>, vector<32x256xf32> -> vector<32x256xf32>
    %167 = vector.broadcast %163 : vector<32x1xf32> to vector<32x256xf32>
    %168 = arith.addf %166, %167 : vector<32x256xf32>
    %169 = vector.extract_strided_slice %161 {offsets = [1, 0, 0], sizes = [1, 16, 256], strides = [1, 1, 1]} : vector<2x16x256xf32> to vector<1x16x256xf32>
    %170 = vector.shape_cast %169 : vector<1x16x256xf32> to vector<16x256xf32>
    %cst_67 = arith.constant dense<0.000000e+00> : vector<32x256xf32>
    %171 = tpu.matmul %162, %170, %cst_67 {dimension_numbers = #tpu.dot_dimension_numbers<[1], [0], [0], [1], [0, 0, 1, 1], [], []>} : vector<32x16xf32>, vector<16x256xf32>, vector<32x256xf32> -> vector<32x256xf32>
    %172 = vector.broadcast %163 : vector<32x1xf32> to vector<32x256xf32>
    %173 = arith.addf %171, %172 : vector<32x256xf32>
    %174 = vector.shape_cast %168 : vector<32x256xf32> to vector<1x32x256xf32>
    %175 = vector.shape_cast %173 : vector<32x256xf32> to vector<1x32x256xf32>
    %176 = tpu.concatenate %174, %175 in 0 : vector<1x32x256xf32>, vector<1x32x256xf32> -> vector<2x32x256xf32>
    %c0_68 = arith.constant 0 : index
    %c0_69 = arith.constant 0 : index
    %177 = vector.load %arg17[%c0_68, %c0_69] : memref<32x1xf32, #tpu.memory_space<vmem>>, vector<32x1xf32>
    %c0_70 = arith.constant 0 : index
    %c0_71 = arith.constant 0 : index
    %178 = vector.load %arg18[%c0_70, %c0_71] : memref<32x1xf32, #tpu.memory_space<vmem>>, vector<32x1xf32>
    %cst_72 = arith.constant dense<0.000000e+00> : vector<2x32xf32>
    %179 = vector.multi_reduction <add>, %176, %cst_72 [2] : vector<2x32x256xf32> to vector<2x32xf32>
    %180 = vector.shape_cast %179 : vector<2x32xf32> to vector<2x32x1xf32>
    %cst_73 = arith.constant 2.560000e+02 : f32
    %181 = vector.broadcast %cst_73 : f32 to vector<2x32x1xf32>
    %182 = arith.divf %180, %181 : vector<2x32x1xf32>
    %183 = vector.broadcast %182 : vector<2x32x1xf32> to vector<2x32x256xf32>
    %184 = arith.subf %176, %183 : vector<2x32x256xf32>
    %185 = vector.broadcast %182 : vector<2x32x1xf32> to vector<2x32x256xf32>
    %186 = arith.subf %176, %185 : vector<2x32x256xf32>
    %187 = arith.mulf %184, %186 : vector<2x32x256xf32>
    %cst_74 = arith.constant dense<0.000000e+00> : vector<2x32xf32>
    %188 = vector.multi_reduction <add>, %187, %cst_74 [2] : vector<2x32x256xf32> to vector<2x32xf32>
    %189 = vector.shape_cast %188 : vector<2x32xf32> to vector<2x32x1xf32>
    %cst_75 = arith.constant 2.560000e+02 : f32
    %190 = vector.broadcast %cst_75 : f32 to vector<2x32x1xf32>
    %191 = arith.divf %189, %190 : vector<2x32x1xf32>
    %cst_76 = arith.constant 9.99999974E-6 : f32
    %192 = vector.broadcast %cst_76 : f32 to vector<2x32x1xf32>
    %193 = arith.addf %191, %192 : vector<2x32x1xf32>
    %194 = math.rsqrt %193 : vector<2x32x1xf32>
    %195 = arith.mulf %191, %194 : vector<2x32x1xf32>
    %196 = arith.mulf %195, %194 : vector<2x32x1xf32>
    %cst_77 = arith.constant dense<0.000000e+00> : vector<32x1xf32>
    %197 = vector.multi_reduction <add>, %196, %cst_77 [0] : vector<2x32x1xf32> to vector<32x1xf32>
    %198 = vector.shape_cast %197 : vector<32x1xf32> to vector<1x32x1xf32>
    %cst_78 = arith.constant 2.000000e+00 : f32
    %199 = vector.broadcast %cst_78 : f32 to vector<1x32x1xf32>
    %200 = arith.divf %198, %199 : vector<1x32x1xf32>
    %cst_79 = arith.constant 9.99999974E-6 : f32
    %201 = vector.broadcast %cst_79 : f32 to vector<1x32x1xf32>
    %202 = arith.addf %200, %201 : vector<1x32x1xf32>
    %203 = math.rsqrt %202 : vector<1x32x1xf32>
    %204 = vector.shape_cast %177 : vector<32x1xf32> to vector<1x32x1xf32>
    %205 = arith.mulf %204, %203 : vector<1x32x1xf32>
    %206 = vector.broadcast %205 : vector<1x32x1xf32> to vector<2x32x1xf32>
    %207 = arith.mulf %206, %194 : vector<2x32x1xf32>
    %208 = vector.broadcast %182 : vector<2x32x1xf32> to vector<2x32x256xf32>
    %209 = arith.subf %176, %208 : vector<2x32x256xf32>
    %210 = vector.broadcast %207 : vector<2x32x1xf32> to vector<2x32x256xf32>
    %211 = arith.mulf %209, %210 : vector<2x32x256xf32>
    %212 = vector.shape_cast %178 : vector<32x1xf32> to vector<1x32x1xf32>
    %213 = vector.broadcast %212 : vector<1x32x1xf32> to vector<2x32x256xf32>
    %214 = arith.addf %211, %213 : vector<2x32x256xf32>
    %215 = arith.addf %214, %57 : vector<2x32x256xf32>
    %cst_80 = arith.constant 0.000000e+00 : f32
    %216 = vector.broadcast %cst_80 : f32 to vector<2x32x256xf32>
    %217 = arith.maximumf %215, %216 : vector<2x32x256xf32>
    %c0_81 = arith.constant 0 : index
    %c0_82 = arith.constant 0 : index
    %c0_83 = arith.constant 0 : index
    %218 = vector.load %arg19[%c0_81, %c0_82, %c0_83] : memref<2x32x256xf32, #tpu.memory_space<vmem>>, vector<2x32x256xf32>
    tpu.vector_store %arg19[%c0_81, %c0_82, %c0_83], %217 {strides = array<i32>} : memref<2x32x256xf32, #tpu.memory_space<vmem>>, vector<2x32x256xf32>,
    return
  }
}

</mosaic_0001>

<llo_original>
// kernel: tpu_custom_call.1
$region0: #{tpu_custom_call.1}
  #allocation0 [shape = 'u32[]', space=smem, size = 0x4, offset = 0x4, fixed_abs, tag = 'smem constant byte address 0x4 - core index']
  #allocation1 [shape = 'u32[144,128]{1,0:T(1,128)}', space=vmem, size = 0x12000, scoped, tag = 'internal scratch']
  %s0 = inlined_call_operand.vmem [shape: f32[2,8,256], index: 0, kind: input, shape index: {}]
  %s1 = inlined_call_operand.vmem [shape: f32[48,8], index: 1, kind: input, shape index: {}]
  %s2 = inlined_call_operand.vmem [shape: f32[48,1], index: 2, kind: input, shape index: {}]
  %s3 = inlined_call_operand.vmem [shape: f32[16,1], index: 3, kind: input, shape index: {}]
  %s4 = inlined_call_operand.vmem [shape: f32[16,1], index: 4, kind: input, shape index: {}]
  %s5 = inlined_call_operand.vmem [shape: f32[16,16], index: 5, kind: input, shape index: {}]
  %s6 = inlined_call_operand.vmem [shape: f32[16,1], index: 6, kind: input, shape index: {}]
  %s7 = inlined_call_operand.vmem [shape: f32[16,1], index: 7, kind: input, shape index: {}]
  %s8 = inlined_call_operand.vmem [shape: f32[16,1], index: 8, kind: input, shape index: {}]
  %s9 = inlined_call_operand.vmem [shape: f32[16,32], index: 9, kind: input, shape index: {}]
  %s10 = inlined_call_operand.vmem [shape: f32[1,32], index: 10, kind: input, shape index: {}]
  %s11 = inlined_call_operand.vmem [shape: f32[1,32], index: 11, kind: input, shape index: {}]
  %s12 = inlined_call_operand.vmem [shape: f32[1,32], index: 12, kind: input, shape index: {}]
  %s13 = inlined_call_operand.vmem [shape: f32[32,16], index: 13, kind: input, shape index: {}]
  %s14 = inlined_call_operand.vmem [shape: f32[1,16], index: 14, kind: input, shape index: {}]
  %s15 = inlined_call_operand.vmem [shape: f32[32,16], index: 15, kind: input, shape index: {}]
  %s16 = inlined_call_operand.vmem [shape: f32[32,1], index: 16, kind: input, shape index: {}]
  %s17 = inlined_call_operand.vmem [shape: f32[32,1], index: 17, kind: input, shape index: {}]
  %s18 = inlined_call_operand.vmem [shape: f32[32,1], index: 18, kind: input, shape index: {}]
  %s19 = inlined_call_operand.hbm [shape: f32[2,32,256], index: 19, kind: output, shape index: {}]
  %s20 = sld [smem:[#allocation0]]
  $region86: #{tpu_custom_call.1} parent=0
    _
  %s22 = ssub.s32 1, %s20
  %s23 = scalar_select 0, %s22, %s20
  $region1: #{tpu_custom_call.1} parent=0
    #allocation2 [shape = 'u8[65536]{0}', space=vmem, size = 0x10000, scoped, tag = 'output window, operand 0, single buffered']
    #allocation3 [shape = 's32[1]{0}', space=sflag, size = 0x4, scoped, tag = 'scoped memory for tpu_custom_call.1']
    %24 = vsyncpa [#allocation3], 0
    // Predicated region
    $region2: #{tpu_custom_call.1} parent=1 // pred_check
      _
    $region3: #{tpu_custom_call.1} parent=1 // pred_check_branch
      %26 = sbr.rel (0) target = $region5
    $region4: #{tpu_custom_call.1} parent=1 // pred_region
      _
    $region5: #{tpu_custom_call.1} parent=1 // pred_fallthru
      _
    // Predicated region
    $region6: #{tpu_custom_call.1} parent=1 // pred_check
      _
    $region7: #{tpu_custom_call.1} parent=1 // pred_check_branch
      %28 = sbr.rel (0) target = $region9
    $region8: #{tpu_custom_call.1} parent=1 // pred_region
      _
    $region9: #{tpu_custom_call.1} parent=1 // pred_fallthru
      _
    // Predicated region
    $region10: #{tpu_custom_call.1} parent=1 // pred_check
      _
    $region11: #{tpu_custom_call.1} parent=1 // pred_check_branch
      %30 = sbr.rel (0) target = $region13
    $region12: #{tpu_custom_call.1} parent=1 // pred_region
      _
    $region13: #{tpu_custom_call.1} parent=1 // pred_fallthru
      _
    // Predicated region
    $region14: #{tpu_custom_call.1} parent=1 // pred_check
      _
    $region15: #{tpu_custom_call.1} parent=1 // pred_check_branch
      %32 = sbr.rel (0) target = $region17
    $region16: #{tpu_custom_call.1} parent=1 // pred_region
      _
    $region17: #{tpu_custom_call.1} parent=1 // pred_fallthru
      _
    // Predicated region
    $region18: #{tpu_custom_call.1} parent=1 // pred_check
      _
    $region19: #{tpu_custom_call.1} parent=1 // pred_check_branch
      %34 = sbr.rel (0) target = $region21
    $region20: #{tpu_custom_call.1} parent=1 // pred_region
      _
    $region21: #{tpu_custom_call.1} parent=1 // pred_fallthru
      _
    // Predicated region
    $region22: #{tpu_custom_call.1} parent=1 // pred_check
      _
    $region23: #{tpu_custom_call.1} parent=1 // pred_check_branch
      %36 = sbr.rel (0) target = $region25
    $region24: #{tpu_custom_call.1} parent=1 // pred_region
      _
    $region25: #{tpu_custom_call.1} parent=1 // pred_fallthru
      _
    // Predicated region
    $region26: #{tpu_custom_call.1} parent=1 // pred_check
      _
    $region27: #{tpu_custom_call.1} parent=1 // pred_check_branch
      %38 = sbr.rel (0) target = $region29
    $region28: #{tpu_custom_call.1} parent=1 // pred_region
      _
    $region29: #{tpu_custom_call.1} parent=1 // pred_fallthru
      _
    // Predicated region
    $region30: #{tpu_custom_call.1} parent=1 // pred_check
      _
    $region31: #{tpu_custom_call.1} parent=1 // pred_check_branch
      %40 = sbr.rel (0) target = $region33
    $region32: #{tpu_custom_call.1} parent=1 // pred_region
      _
    $region33: #{tpu_custom_call.1} parent=1 // pred_fallthru
      _
    // Predicated region
    $region34: #{tpu_custom_call.1} parent=1 // pred_check
      _
    $region35: #{tpu_custom_call.1} parent=1 // pred_check_branch
      %42 = sbr.rel (0) target = $region37
    $region36: #{tpu_custom_call.1} parent=1 // pred_region
      _
    $region37: #{tpu_custom_call.1} parent=1 // pred_fallthru
      _
    // Predicated region
    $region38: #{tpu_custom_call.1} parent=1 // pred_check
      _
    $region39: #{tpu_custom_call.1} parent=1 // pred_check_branch
      %44 = sbr.rel (0) target = $region41
    $region40: #{tpu_custom_call.1} parent=1 // pred_region
      _
    $region41: #{tpu_custom_call.1} parent=1 // pred_fallthru
      _
    // Predicated region
    $region42: #{tpu_custom_call.1} parent=1 // pred_check
      _
    $region43: #{tpu_custom_call.1} parent=1 // pred_check_branch
      %46 = sbr.rel (0) target = $region45
    $region44: #{tpu_custom_call.1} parent=1 // pred_region
      _
    $region45: #{tpu_custom_call.1} parent=1 // pred_fallthru
      _
    // Predicated region
    $region46: #{tpu_custom_call.1} parent=1 // pred_check
      _
    $region47: #{tpu_custom_call.1} parent=1 // pred_check_branch
      %48 = sbr.rel (0) target = $region49
    $region48: #{tpu_custom_call.1} parent=1 // pred_region
      _
    $region49: #{tpu_custom_call.1} parent=1 // pred_fallthru
      _
    // Predicated region
    $region50: #{tpu_custom_call.1} parent=1 // pred_check
      _
    $region51: #{tpu_custom_call.1} parent=1 // pred_check_branch
      %50 = sbr.rel (0) target = $region53
    $region52: #{tpu_custom_call.1} parent=1 // pred_region
      _
    $region53: #{tpu_custom_call.1} parent=1 // pred_fallthru
      _
    // Predicated region
    $region54: #{tpu_custom_call.1} parent=1 // pred_check
      _
    $region55: #{tpu_custom_call.1} parent=1 // pred_check_branch
      %52 = sbr.rel (0) target = $region57
    $region56: #{tpu_custom_call.1} parent=1 // pred_region
      _
    $region57: #{tpu_custom_call.1} parent=1 // pred_fallthru
      _
    // Predicated region
    $region58: #{tpu_custom_call.1} parent=1 // pred_check
      _
    $region59: #{tpu_custom_call.1} parent=1 // pred_check_branch
      %54 = sbr.rel (0) target = $region61
    $region60: #{tpu_custom_call.1} parent=1 // pred_region
      _
    $region61: #{tpu_custom_call.1} parent=1 // pred_fallthru
      _
    // Predicated region
    $region62: #{tpu_custom_call.1} parent=1 // pred_check
      _
    $region63: #{tpu_custom_call.1} parent=1 // pred_check_branch
      %56 = sbr.rel (0) target = $region65
    $region64: #{tpu_custom_call.1} parent=1 // pred_region
      _
    $region65: #{tpu_custom_call.1} parent=1 // pred_fallthru
      _
    // Predicated region
    $region66: #{tpu_custom_call.1} parent=1 // pred_check
      _
    $region67: #{tpu_custom_call.1} parent=1 // pred_check_branch
      %58 = sbr.rel (0) target = $region69
    $region68: #{tpu_custom_call.1} parent=1 // pred_region
      _
    $region69: #{tpu_custom_call.1} parent=1 // pred_fallthru
      _
    // Predicated region
    $region70: #{tpu_custom_call.1} parent=1 // pred_check
      _
    $region71: #{tpu_custom_call.1} parent=1 // pred_check_branch
      %60 = sbr.rel (0) target = $region73
    $region72: #{tpu_custom_call.1} parent=1 // pred_region
      _
    $region73: #{tpu_custom_call.1} parent=1 // pred_fallthru
      _
    // Predicated region
    $region74: #{tpu_custom_call.1} parent=1 // pred_check
      _
    $region75: #{tpu_custom_call.1} parent=1 // pred_check_branch
      %62 = sbr.rel (0) target = $region77
    $region76: #{tpu_custom_call.1} parent=1 // pred_region
      _
    $region77: #{tpu_custom_call.1} parent=1 // pred_fallthru
      _
    %v63 = vld [vmem:[%s0] sm:$0xff]
    %v64 = vld [vmem:[%s0 + $0x8] sm:$0xff]
    %v65 = vld [vmem:[%s0 + $0x10] sm:$0xff]
    %v66 = vld [vmem:[%s0 + $0x18] sm:$0xff]
    %v67 = vld [vmem:[%s1] sm:$0xff]
    %v68 = vld [vmem:[%s1 + $0x8] sm:$0xff]
    %v69 = vld [vmem:[%s1 + $0x10] sm:$0xff]
    %v70 = vld [vmem:[%s1 + $0x18] sm:$0xff]
    %v71 = vld [vmem:[%s1 + $0x20] sm:$0xff]
    %v72 = vld [vmem:[%s1 + $0x28] sm:$0xff]
    %v73 = vld [vmem:[%s2] sm:$0xff]
    %v74 = vld [vmem:[%s2 + $0x8] sm:$0xff]
    %v75 = vld [vmem:[%s2 + $0x10] sm:$0xff]
    %v76 = vld [vmem:[%s2 + $0x18] sm:$0xff]
    %v77 = vld [vmem:[%s2 + $0x20] sm:$0xff]
    %v78 = vld [vmem:[%s2 + $0x28] sm:$0xff]
    %80 = vset.pattern.permute.xlu0 0
    %81 = vperm.xlu0 %80, %v73
    %v82 = vpop.permute.xlu0 %81
    %85 = vset.pattern.permute.xlu0 0
    %86 = vperm.xlu0 %85, %v74
    %v87 = vpop.permute.xlu0 %86
    %90 = vset.pattern.permute.xlu0 0
    %91 = vperm.xlu0 %90, %v75
    %v92 = vpop.permute.xlu0 %91
    %95 = vset.pattern.permute.xlu0 0
    %96 = vperm.xlu0 %95, %v76
    %v97 = vpop.permute.xlu0 %96
    %100 = vset.pattern.permute.xlu0 0
    %101 = vperm.xlu0 %100, %v77
    %v102 = vpop.permute.xlu0 %101
    %105 = vset.pattern.permute.xlu0 0
    %106 = vperm.xlu0 %105, %v78
    %v107 = vpop.permute.xlu0 %106
    %vm109 = vcmask 64512
    %v111 = vsel %vm109, %v67, 0
    %v114 = vsel %vm109, %v68, 0
    %v117 = vsel %vm109, %v69, 0
    %v120 = vsel %vm109, %v70, 0
    %v123 = vsel %vm109, %v71, 0
    %v126 = vsel %vm109, %v72, 0
    %128 = vmatprep.subr.mxu0 %v64
    %129 = vmatpush1.msra.mxu0 %v63
    %130 = vmatprep.subr.mxu0 0.0
    %131 = vmatpush1.msra.mxu0 0.0
    %132 = vmatprep.subr.mxu0 0.0
    %133 = vmatpush1.msra.mxu0 0.0
    %134 = vmatprep.subr.mxu0 0.0
    %135 = vmatpush1.msra.mxu0 0.0
    %136 = vmatprep.subr.mxu0 0.0
    %137 = vmatpush1.msra.mxu0 0.0
    %138 = vmatprep.subr.mxu0 0.0
    %139 = vmatpush1.msra.mxu0 0.0
    %140 = vmatprep.subr.mxu0 0.0
    %141 = vmatpush1.msra.mxu0 0.0
    %142 = vmatprep.subr.mxu0 0.0
    %143 = vmatpush1.msra.mxu0 0.0
    %144 = vmatprep.subr.mxu0 0.0
    %145 = vmatpush1.msra.mxu0 0.0
    %146 = vmatprep.subr.mxu0 0.0
    %147 = vmatpush1.msra.mxu0 0.0
    %148 = vmatprep.subr.mxu0 0.0
    %149 = vmatpush1.msra.mxu0 0.0
    %150 = vmatprep.subr.mxu0 0.0
    %151 = vmatpush1.msra.mxu0 0.0
    %152 = vmatprep.subr.mxu0 0.0
    %153 = vmatpush1.msra.mxu0 0.0
    %154 = vmatprep.subr.mxu0 0.0
    %155 = vmatpush1.msra.mxu0 0.0
    %156 = vmatprep.subr.mxu0 0.0
    %157 = vmatpush1.msra.mxu0 0.0
    %158 = vmatprep.subr.mxu0 0.0
    %159 = vmatpush1.msra.mxu0 0.0
    %160 = vmatprep.subr.mxu0 0.0
    %161 = vmatpush1.msra.mxu0 0.0
    %162 = vmatprep.subr.mxu0 0.0
    %163 = vmatpush1.msra.mxu0 0.0
    %164 = vmatprep.subr.mxu0 0.0
    %165 = vmatpush1.msra.mxu0 0.0
    %166 = vmatprep.subr.mxu0 0.0
    %167 = vmatpush1.msra.mxu0 0.0
    %168 = vmatprep.subr.mxu0 0.0
    %169 = vmatpush1.msra.mxu0 0.0
    %170 = vmatprep.subr.mxu0 0.0
    %171 = vmatpush1.msra.mxu0 0.0
    %172 = vmatprep.subr.mxu0 0.0
    %173 = vmatpush1.msra.mxu0 0.0
    %174 = vmatprep.subr.mxu0 0.0
    %175 = vmatpush1.msra.mxu0 0.0
    %176 = vmatprep.subr.mxu0 0.0
    %177 = vmatpush1.msra.mxu0 0.0
    %178 = vmatprep.subr.mxu0 0.0
    %179 = vmatpush1.msra.mxu0 0.0
    %180 = vmatprep.subr.mxu0 0.0
    %181 = vmatpush1.msra.mxu0 0.0
    %182 = vmatprep.subr.mxu0 0.0
    %183 = vmatpush1.msra.mxu0 0.0
    %184 = vmatprep.subr.mxu0 0.0
    %185 = vmatpush1.msra.mxu0 0.0
    %186 = vmatprep.subr.mxu0 0.0
    %187 = vmatpush1.msra.mxu0 0.0
    %188 = vmatprep.subr.mxu0 0.0
    %189 = vmatpush1.msra.mxu0 0.0
    %190 = vmatprep.subr.mxu0 0.0
    %191 = vmatpush1.msra.mxu0 0.0
    %192 = vmatprep.mubr.f32.mxu0 0.0
    %193 = vmatmul.mubr.f32.gmra.mrb[0].mxu0 %v111
    %v194 = vpop.f32.mrb[0].mxu0
    %v195 = vadd.f32 %v82, %v194
    %v196 = vpop.f32.mrb[0].mxu0
    %v197 = vadd.f32 %v82, %v196
    %198 = vmatprep.mubr.f32.mxu0 0.0
    %199 = vmatmul.mubr.f32.gmra.mrb[0].mxu0 %v114
    %v200 = vpop.f32.mrb[0].mxu0
    %v201 = vadd.f32 %v87, %v200
    %v202 = vpop.f32.mrb[0].mxu0
    %v203 = vadd.f32 %v87, %v202
    %204 = vmatprep.mubr.f32.mxu0 0.0
    %205 = vmatmul.mubr.f32.gmra.mrb[0].mxu0 %v117
    %v206 = vpop.f32.mrb[0].mxu0
    %v207 = vadd.f32 %v92, %v206
    %v208 = vpop.f32.mrb[0].mxu0
    %v209 = vadd.f32 %v92, %v208
    %210 = vmatprep.mubr.f32.mxu0 0.0
    %211 = vmatmul.mubr.f32.gmra.mrb[0].mxu0 %v120
    %v212 = vpop.f32.mrb[0].mxu0
    %v213 = vadd.f32 %v97, %v212
    %v214 = vpop.f32.mrb[0].mxu0
    %v215 = vadd.f32 %v97, %v214
    %216 = vmatprep.mubr.f32.mxu0 0.0
    %217 = vmatmul.mubr.f32.gmra.mrb[0].mxu0 %v123
    %v218 = vpop.f32.mrb[0].mxu0
    %v219 = vadd.f32 %v102, %v218
    %v220 = vpop.f32.mrb[0].mxu0
    %v221 = vadd.f32 %v102, %v220
    %222 = vmatprep.mubr.f32.mxu0 0.0
    %223 = vmatmul.mubr.f32.gmra.mrb[0].mxu0 %v126
    %v224 = vpop.f32.mrb[0].mxu0
    %v225 = vadd.f32 %v107, %v224
    %v226 = vpop.f32.mrb[0].mxu0
    %v227 = vadd.f32 %v107, %v226
    %228 = vdwg.mxu0
    %229 = vmatprep.subr.mxu0 %v66
    %230 = vmatpush1.msra.mxu0 %v65
    %231 = vmatprep.subr.mxu0 0.0
    %232 = vmatpush1.msra.mxu0 0.0
    %233 = vmatprep.subr.mxu0 0.0
    %234 = vmatpush1.msra.mxu0 0.0
    %235 = vmatprep.subr.mxu0 0.0
    %236 = vmatpush1.msra.mxu0 0.0
    %237 = vmatprep.subr.mxu0 0.0
    %238 = vmatpush1.msra.mxu0 0.0
    %239 = vmatprep.subr.mxu0 0.0
    %240 = vmatpush1.msra.mxu0 0.0
    %241 = vmatprep.subr.mxu0 0.0
    %242 = vmatpush1.msra.mxu0 0.0
    %243 = vmatprep.subr.mxu0 0.0
    %244 = vmatpush1.msra.mxu0 0.0
    %245 = vmatprep.subr.mxu0 0.0
    %246 = vmatpush1.msra.mxu0 0.0
    %247 = vmatprep.subr.mxu0 0.0
    %248 = vmatpush1.msra.mxu0 0.0
    %249 = vmatprep.subr.mxu0 0.0
    %250 = vmatpush1.msra.mxu0 0.0
    %251 = vmatprep.subr.mxu0 0.0
    %252 = vmatpush1.msra.mxu0 0.0
    %253 = vmatprep.subr.mxu0 0.0
    %254 = vmatpush1.msra.mxu0 0.0
    %255 = vmatprep.subr.mxu0 0.0
    %256 = vmatpush1.msra.mxu0 0.0
    %257 = vmatprep.subr.mxu0 0.0
    %258 = vmatpush1.msra.mxu0 0.0
    %259 = vmatprep.subr.mxu0 0.0
    %260 = vmatpush1.msra.mxu0 0.0
    %261 = vmatprep.subr.mxu0 0.0
    %262 = vmatpush1.msra.mxu0 0.0
    %263 = vmatprep.subr.mxu0 0.0
    %264 = vmatpush1.msra.mxu0 0.0
    %265 = vmatprep.subr.mxu0 0.0
    %266 = vmatpush1.msra.mxu0 0.0
    %267 = vmatprep.subr.mxu0 0.0
    %268 = vmatpush1.msra.mxu0 0.0
    %269 = vmatprep.subr.mxu0 0.0
    %270 = vmatpush1.msra.mxu0 0.0
    %271 = vmatprep.subr.mxu0 0.0
    %272 = vmatpush1.msra.mxu0 0.0
    %273 = vmatprep.subr.mxu0 0.0
    %274 = vmatpush1.msra.mxu0 0.0
    %275 = vmatprep.subr.mxu0 0.0
    %276 = vmatpush1.msra.mxu0 0.0
    %277 = vmatprep.subr.mxu0 0.0
    %278 = vmatpush1.msra.mxu0 0.0
    %279 = vmatprep.subr.mxu0 0.0
    %280 = vmatpush1.msra.mxu0 0.0
    %281 = vmatprep.subr.mxu0 0.0
    %282 = vmatpush1.msra.mxu0 0.0
    %283 = vmatprep.subr.mxu0 0.0
    %284 = vmatpush1.msra.mxu0 0.0
    %285 = vmatprep.subr.mxu0 0.0
    %286 = vmatpush1.msra.mxu0 0.0
    %287 = vmatprep.subr.mxu0 0.0
    %288 = vmatpush1.msra.mxu0 0.0
    %289 = vmatprep.subr.mxu0 0.0
    %290 = vmatpush1.msra.mxu0 0.0
    %291 = vmatprep.subr.mxu0 0.0
    %292 = vmatpush1.msra.mxu0 0.0
    %293 = vmatprep.mubr.f32.mxu0 0.0
    %294 = vmatmul.mubr.f32.gmra.mrb[0].mxu0 %v111
    %v295 = vpop.f32.mrb[0].mxu0
    %v296 = vadd.f32 %v82, %v295
    %v297 = vpop.f32.mrb[0].mxu0
    %v298 = vadd.f32 %v82, %v297
    %299 = vmatprep.mubr.f32.mxu0 0.0
    %300 = vmatmul.mubr.f32.gmra.mrb[0].mxu0 %v114
    %v301 = vpop.f32.mrb[0].mxu0
    %v302 = vadd.f32 %v87, %v301
    %v303 = vpop.f32.mrb[0].mxu0
    %v304 = vadd.f32 %v87, %v303
    %305 = vmatprep.mubr.f32.mxu0 0.0
    %306 = vmatmul.mubr.f32.gmra.mrb[0].mxu0 %v117
    %v307 = vpop.f32.mrb[0].mxu0
    %v308 = vadd.f32 %v92, %v307
    %v309 = vpop.f32.mrb[0].mxu0
    %v310 = vadd.f32 %v92, %v309
    %311 = vmatprep.mubr.f32.mxu0 0.0
    %312 = vmatmul.mubr.f32.gmra.mrb[0].mxu0 %v120
    %v313 = vpop.f32.mrb[0].mxu0
    %v314 = vadd.f32 %v97, %v313
    %v315 = vpop.f32.mrb[0].mxu0
    %v316 = vadd.f32 %v97, %v315
    %317 = vmatprep.mubr.f32.mxu0 0.0
    %318 = vmatmul.mubr.f32.gmra.mrb[0].mxu0 %v123
    %v319 = vpop.f32.mrb[0].mxu0
    %v320 = vadd.f32 %v102, %v319
    %v321 = vpop.f32.mrb[0].mxu0
    %v322 = vadd.f32 %v102, %v321
    %323 = vmatprep.mubr.f32.mxu0 0.0
    %324 = vmatmul.mubr.f32.gmra.mrb[0].mxu0 %v126
    %v325 = vpop.f32.mrb[0].mxu0
    %v326 = vadd.f32 %v107, %v325
    %v327 = vpop.f32.mrb[0].mxu0
    %v328 = vadd.f32 %v107, %v327
    %329 = vdwg.mxu0
    %v330 = vld [vmem:[%s3] sm:$0xff]
    %v331 = vld [vmem:[%s3 + $0x8] sm:$0xff]
    %v332 = vld [vmem:[%s4] sm:$0xff]
    %v333 = vld [vmem:[%s4 + $0x8] sm:$0xff]
    %v334 = vadd.f32 %v195, %v197
    %335 = vadd.xlane.f32.xlu0 %v334
    %v336 = vpop.xlane.xlu0 %335
    %v337 = vadd.f32 %v201, %v203
    %338 = vadd.xlane.f32.xlu0 %v337
    %v339 = vpop.xlane.xlu0 %338
    %v340 = vadd.f32 %v296, %v298
    %341 = vadd.xlane.f32.xlu0 %v340
    %v342 = vpop.xlane.xlu0 %341
    %v343 = vadd.f32 %v302, %v304
    %344 = vadd.xlane.f32.xlu0 %v343
    %v345 = vpop.xlane.xlu0 %344
    %v346 = vrcp.pop 256.0
    %v347 = vmul.f32 %v336, %v346
    %v348 = vmul.f32 %v339, %v346
    %v349 = vmul.f32 %v342, %v346
    %v350 = vmul.f32 %v345, %v346
    %v351 = vsub.f32 %v195, %v347
    %v352 = vsub.f32 %v197, %v347
    %v353 = vsub.f32 %v201, %v348
    %v354 = vsub.f32 %v203, %v348
    %v355 = vsub.f32 %v296, %v349
    %v356 = vsub.f32 %v298, %v349
    %v357 = vsub.f32 %v302, %v350
    %v358 = vsub.f32 %v304, %v350
    %v359 = vmul.f32 %v351, %v351
    %v360 = vmul.f32 %v352, %v352
    %v361 = vmul.f32 %v353, %v353
    %v362 = vmul.f32 %v354, %v354
    %v363 = vmul.f32 %v355, %v355
    %v364 = vmul.f32 %v356, %v356
    %v365 = vmul.f32 %v357, %v357
    %v366 = vmul.f32 %v358, %v358
    %v367 = vadd.f32 %v359, %v360
    %368 = vadd.xlane.f32.xlu0 %v367
    %v369 = vpop.xlane.xlu0 %368
    %v370 = vadd.f32 %v361, %v362
    %371 = vadd.xlane.f32.xlu0 %v370
    %v372 = vpop.xlane.xlu0 %371
    %v373 = vadd.f32 %v363, %v364
    %374 = vadd.xlane.f32.xlu0 %v373
    %v375 = vpop.xlane.xlu0 %374
    %v376 = vadd.f32 %v365, %v366
    %377 = vadd.xlane.f32.xlu0 %v376
    %v378 = vpop.xlane.xlu0 %377
    %v379 = vmul.f32 %v369, %v346
    %v380 = vmul.f32 %v372, %v346
    %v381 = vmul.f32 %v375, %v346
    %v382 = vmul.f32 %v378, %v346
    %v383 = vadd.f32 %v379, 1e-05
    %v384 = vadd.f32 %v380, 1e-05
    %v385 = vadd.f32 %v381, 1e-05
    %v386 = vadd.f32 %v382, 1e-05
    %v387 = vrsqrt.pop %v383
    %v388 = vrsqrt.pop %v384
    %v389 = vrsqrt.pop %v385
    %v390 = vrsqrt.pop %v386
    %v391 = vmul.f32 %v379, %v387
    %v392 = vmul.f32 %v380, %v388
    %v393 = vmul.f32 %v381, %v389
    %v394 = vmul.f32 %v382, %v390
    %v395 = vmul.f32 %v391, %v387
    %v396 = vmul.f32 %v392, %v388
    %v397 = vmul.f32 %v393, %v389
    %v398 = vmul.f32 %v394, %v390
    %v399 = vadd.f32 %v395, %v397
    %v400 = vadd.f32 %v396, %v398
    %v401 = vrcp.pop 2.0
    %v402 = vmul.f32 %v399, %v401
    %v403 = vmul.f32 %v400, %v401
    %v404 = vadd.f32 %v402, 1e-05
    %v405 = vadd.f32 %v403, 1e-05
    %v406 = vrsqrt.pop %v404
    %v407 = vrsqrt.pop %v405
    %v408 = vmul.f32 %v330, %v406
    %v409 = vmul.f32 %v331, %v407
    %v410 = vmul.f32 %v408, %v387
    %v411 = vmul.f32 %v409, %v388
    %v412 = vmul.f32 %v408, %v389
    %v413 = vmul.f32 %v409, %v390
    %415 = vset.pattern.permute.xlu0 0
    %416 = vperm.xlu0 %415, %v410
    %v417 = vpop.permute.xlu0 %416
    %420 = vset.pattern.permute.xlu0 0
    %421 = vperm.xlu0 %420, %v411
    %v422 = vpop.permute.xlu0 %421
    %425 = vset.pattern.permute.xlu0 0
    %426 = vperm.xlu0 %425, %v412
    %v427 = vpop.permute.xlu0 %426
    %430 = vset.pattern.permute.xlu0 0
    %431 = vperm.xlu0 %430, %v413
    %v432 = vpop.permute.xlu0 %431
    %v434 = vmul.f32 %v351, %v417
    %v435 = vmul.f32 %v352, %v417
    %v436 = vmul.f32 %v353, %v422
    %v437 = vmul.f32 %v354, %v422
    %v438 = vmul.f32 %v355, %v427
    %v439 = vmul.f32 %v356, %v427
    %v440 = vmul.f32 %v357, %v432
    %v441 = vmul.f32 %v358, %v432
    %443 = vset.pattern.permute.xlu0 0
    %444 = vperm.xlu0 %443, %v332
    %v445 = vpop.permute.xlu0 %444
    %448 = vset.pattern.permute.xlu0 0
    %449 = vperm.xlu0 %448, %v333
    %v450 = vpop.permute.xlu0 %449
    %v452 = vadd.f32 %v434, %v445
    %v453 = vadd.f32 %v435, %v445
    %v454 = vadd.f32 %v436, %v450
    %v455 = vadd.f32 %v437, %v450
    %v456 = vadd.f32 %v438, %v445
    %v457 = vadd.f32 %v439, %v445
    %v458 = vadd.f32 %v440, %v450
    %v459 = vadd.f32 %v441, %v450
    %v460 = vmax.f32 %v452, 0.0
    %v461 = vmax.f32 %v453, 0.0
    %v462 = vmax.f32 %v454, 0.0
    %v463 = vmax.f32 %v455, 0.0
    %v464 = vmax.f32 %v456, 0.0
    %v465 = vmax.f32 %v457, 0.0
    %v466 = vmax.f32 %v458, 0.0
    %v467 = vmax.f32 %v459, 0.0
    %v468 = vld [vmem:[%s5] sm:$0xff]
    %v469 = vld [vmem:[%s5 + $0x8] sm:$0xff]
    %v470 = vld [vmem:[%s6] sm:$0xff]
    %v471 = vld [vmem:[%s6 + $0x8] sm:$0xff]
    %473 = vset.pattern.permute.xlu0 0
    %474 = vperm.xlu0 %473, %v470
    %v475 = vpop.permute.xlu0 %474
    %478 = vset.pattern.permute.xlu0 0
    %479 = vperm.xlu0 %478, %v471
    %v480 = vpop.permute.xlu0 %479
    %vm482 = vcmask 130048
    %v484 = vsel %vm482, %v468, 0
    %v487 = vsel %vm482, %v469, 0
    %489 = vmatprep.subr.mxu0 %v461
    %490 = vmatpush1.msra.mxu0 %v460
    %491 = vmatprep.subr.mxu0 %v463
    %492 = vmatpush1.msra.mxu0 %v462
    %493 = vmatprep.subr.mxu0 0.0
    %494 = vmatpush1.msra.mxu0 0.0
    %495 = vmatprep.subr.mxu0 0.0
    %496 = vmatpush1.msra.mxu0 0.0
    %497 = vmatprep.subr.mxu0 0.0
    %498 = vmatpush1.msra.mxu0 0.0
    %499 = vmatprep.subr.mxu0 0.0
    %500 = vmatpush1.msra.mxu0 0.0
    %501 = vmatprep.subr.mxu0 0.0
    %502 = vmatpush1.msra.mxu0 0.0
    %503 = vmatprep.subr.mxu0 0.0
    %504 = vmatpush1.msra.mxu0 0.0
    %505 = vmatprep.subr.mxu0 0.0
    %506 = vmatpush1.msra.mxu0 0.0
    %507 = vmatprep.subr.mxu0 0.0
    %508 = vmatpush1.msra.mxu0 0.0
    %509 = vmatprep.subr.mxu0 0.0
    %510 = vmatpush1.msra.mxu0 0.0
    %511 = vmatprep.subr.mxu0 0.0
    %512 = vmatpush1.msra.mxu0 0.0
    %513 = vmatprep.subr.mxu0 0.0
    %514 = vmatpush1.msra.mxu0 0.0
    %515 = vmatprep.subr.mxu0 0.0
    %516 = vmatpush1.msra.mxu0 0.0
    %517 = vmatprep.subr.mxu0 0.0
    %518 = vmatpush1.msra.mxu0 0.0
    %519 = vmatprep.subr.mxu0 0.0
    %520 = vmatpush1.msra.mxu0 0.0
    %521 = vmatprep.subr.mxu0 0.0
    %522 = vmatpush1.msra.mxu0 0.0
    %523 = vmatprep.subr.mxu0 0.0
    %524 = vmatpush1.msra.mxu0 0.0
    %525 = vmatprep.subr.mxu0 0.0
    %526 = vmatpush1.msra.mxu0 0.0
    %527 = vmatprep.subr.mxu0 0.0
    %528 = vmatpush1.msra.mxu0 0.0
    %529 = vmatprep.subr.mxu0 0.0
    %530 = vmatpush1.msra.mxu0 0.0
    %531 = vmatprep.subr.mxu0 0.0
    %532 = vmatpush1.msra.mxu0 0.0
    %533 = vmatprep.subr.mxu0 0.0
    %534 = vmatpush1.msra.mxu0 0.0
    %535 = vmatprep.subr.mxu0 0.0
    %536 = vmatpush1.msra.mxu0 0.0
    %537 = vmatprep.subr.mxu0 0.0
    %538 = vmatpush1.msra.mxu0 0.0
    %539 = vmatprep.subr.mxu0 0.0
    %540 = vmatpush1.msra.mxu0 0.0
    %541 = vmatprep.subr.mxu0 0.0
    %542 = vmatpush1.msra.mxu0 0.0
    %543 = vmatprep.subr.mxu0 0.0
    %544 = vmatpush1.msra.mxu0 0.0
    %545 = vmatprep.subr.mxu0 0.0
    %546 = vmatpush1.msra.mxu0 0.0
    %547 = vmatprep.subr.mxu0 0.0
    %548 = vmatpush1.msra.mxu0 0.0
    %549 = vmatprep.subr.mxu0 0.0
    %550 = vmatpush1.msra.mxu0 0.0
    %551 = vmatprep.subr.mxu0 0.0
    %552 = vmatpush1.msra.mxu0 0.0
    %553 = vmatprep.mubr.f32.mxu0 0.0
    %554 = vmatmul.mubr.f32.gmra.mrb[0].mxu0 %v484
    %v555 = vpop.f32.mrb[0].mxu0
    %v556 = vadd.f32 %v475, %v555
    %v557 = vpop.f32.mrb[0].mxu0
    %v558 = vadd.f32 %v475, %v557
    %559 = vmatprep.mubr.f32.mxu0 0.0
    %560 = vmatmul.mubr.f32.gmra.mrb[0].mxu0 %v487
    %v561 = vpop.f32.mrb[0].mxu0
    %v562 = vadd.f32 %v480, %v561
    %v563 = vpop.f32.mrb[0].mxu0
    %v564 = vadd.f32 %v480, %v563
    %565 = vdwg.mxu0
    %566 = vmatprep.subr.mxu0 %v465
    %567 = vmatpush1.msra.mxu0 %v464
    %568 = vmatprep.subr.mxu0 %v467
    %569 = vmatpush1.msra.mxu0 %v466
    %570 = vmatprep.subr.mxu0 0.0
    %571 = vmatpush1.msra.mxu0 0.0
    %572 = vmatprep.subr.mxu0 0.0
    %573 = vmatpush1.msra.mxu0 0.0
    %574 = vmatprep.subr.mxu0 0.0
    %575 = vmatpush1.msra.mxu0 0.0
    %576 = vmatprep.subr.mxu0 0.0
    %577 = vmatpush1.msra.mxu0 0.0
    %578 = vmatprep.subr.mxu0 0.0
    %579 = vmatpush1.msra.mxu0 0.0
    %580 = vmatprep.subr.mxu0 0.0
    %581 = vmatpush1.msra.mxu0 0.0
    %582 = vmatprep.subr.mxu0 0.0
    %583 = vmatpush1.msra.mxu0 0.0
    %584 = vmatprep.subr.mxu0 0.0
    %585 = vmatpush1.msra.mxu0 0.0
    %586 = vmatprep.subr.mxu0 0.0
    %587 = vmatpush1.msra.mxu0 0.0
    %588 = vmatprep.subr.mxu0 0.0
    %589 = vmatpush1.msra.mxu0 0.0
    %590 = vmatprep.subr.mxu0 0.0
    %591 = vmatpush1.msra.mxu0 0.0
    %592 = vmatprep.subr.mxu0 0.0
    %593 = vmatpush1.msra.mxu0 0.0
    %594 = vmatprep.subr.mxu0 0.0
    %595 = vmatpush1.msra.mxu0 0.0
    %596 = vmatprep.subr.mxu0 0.0
    %597 = vmatpush1.msra.mxu0 0.0
    %598 = vmatprep.subr.mxu0 0.0
    %599 = vmatpush1.msra.mxu0 0.0
    %600 = vmatprep.subr.mxu0 0.0
    %601 = vmatpush1.msra.mxu0 0.0
    %602 = vmatprep.subr.mxu0 0.0
    %603 = vmatpush1.msra.mxu0 0.0
    %604 = vmatprep.subr.mxu0 0.0
    %605 = vmatpush1.msra.mxu0 0.0
    %606 = vmatprep.subr.mxu0 0.0
    %607 = vmatpush1.msra.mxu0 0.0
    %608 = vmatprep.subr.mxu0 0.0
    %609 = vmatpush1.msra.mxu0 0.0
    %610 = vmatprep.subr.mxu0 0.0
    %611 = vmatpush1.msra.mxu0 0.0
    %612 = vmatprep.subr.mxu0 0.0
    %613 = vmatpush1.msra.mxu0 0.0
    %614 = vmatprep.subr.mxu0 0.0
    %615 = vmatpush1.msra.mxu0 0.0
    %616 = vmatprep.subr.mxu0 0.0
    %617 = vmatpush1.msra.mxu0 0.0
    %618 = vmatprep.subr.mxu0 0.0
    %619 = vmatpush1.msra.mxu0 0.0
    %620 = vmatprep.subr.mxu0 0.0
    %621 = vmatpush1.msra.mxu0 0.0
    %622 = vmatprep.subr.mxu0 0.0
    %623 = vmatpush1.msra.mxu0 0.0
    %624 = vmatprep.subr.mxu0 0.0
    %625 = vmatpush1.msra.mxu0 0.0
    %626 = vmatprep.subr.mxu0 0.0
    %627 = vmatpush1.msra.mxu0 0.0
    %628 = vmatprep.subr.mxu0 0.0
    %629 = vmatpush1.msra.mxu0 0.0
    %630 = vmatprep.mubr.f32.mxu0 0.0
    %631 = vmatmul.mubr.f32.gmra.mrb[0].mxu0 %v484
    %v632 = vpop.f32.mrb[0].mxu0
    %v633 = vadd.f32 %v475, %v632
    %v634 = vpop.f32.mrb[0].mxu0
    %v635 = vadd.f32 %v475, %v634
    %636 = vmatprep.mubr.f32.mxu0 0.0
    %637 = vmatmul.mubr.f32.gmra.mrb[0].mxu0 %v487
    %v638 = vpop.f32.mrb[0].mxu0
    %v639 = vadd.f32 %v480, %v638
    %v640 = vpop.f32.mrb[0].mxu0
    %v641 = vadd.f32 %v480, %v640
    %642 = vdwg.mxu0
    %v643 = vld [vmem:[%s7] sm:$0xff]
    %v644 = vld [vmem:[%s7 + $0x8] sm:$0xff]
    %v645 = vld [vmem:[%s8] sm:$0xff]
    %v646 = vld [vmem:[%s8 + $0x8] sm:$0xff]
    %v647 = vadd.f32 %v556, %v558
    %648 = vadd.xlane.f32.xlu0 %v647
    %v649 = vpop.xlane.xlu0 %648
    %v650 = vadd.f32 %v562, %v564
    %651 = vadd.xlane.f32.xlu0 %v650
    %v652 = vpop.xlane.xlu0 %651
    %v653 = vadd.f32 %v633, %v635
    %654 = vadd.xlane.f32.xlu0 %v653
    %v655 = vpop.xlane.xlu0 %654
    %v656 = vadd.f32 %v639, %v641
    %657 = vadd.xlane.f32.xlu0 %v656
    %v658 = vpop.xlane.xlu0 %657
    %v659 = vmul.f32 %v649, %v346
    %v660 = vmul.f32 %v652, %v346
    %v661 = vmul.f32 %v655, %v346
    %v662 = vmul.f32 %v658, %v346
    %v663 = vsub.f32 %v556, %v659
    %v664 = vsub.f32 %v558, %v659
    %v665 = vsub.f32 %v562, %v660
    %v666 = vsub.f32 %v564, %v660
    %v667 = vsub.f32 %v633, %v661
    %v668 = vsub.f32 %v635, %v661
    %v669 = vsub.f32 %v639, %v662
    %v670 = vsub.f32 %v641, %v662
    %v671 = vmul.f32 %v663, %v663
    %v672 = vmul.f32 %v664, %v664
    %v673 = vmul.f32 %v665, %v665
    %v674 = vmul.f32 %v666, %v666
    %v675 = vmul.f32 %v667, %v667
    %v676 = vmul.f32 %v668, %v668
    %v677 = vmul.f32 %v669, %v669
    %v678 = vmul.f32 %v670, %v670
    %v679 = vadd.f32 %v671, %v672
    %680 = vadd.xlane.f32.xlu0 %v679
    %v681 = vpop.xlane.xlu0 %680
    %v682 = vadd.f32 %v673, %v674
    %683 = vadd.xlane.f32.xlu0 %v682
    %v684 = vpop.xlane.xlu0 %683
    %v685 = vadd.f32 %v675, %v676
    %686 = vadd.xlane.f32.xlu0 %v685
    %v687 = vpop.xlane.xlu0 %686
    %v688 = vadd.f32 %v677, %v678
    %689 = vadd.xlane.f32.xlu0 %v688
    %v690 = vpop.xlane.xlu0 %689
    %v691 = vmul.f32 %v681, %v346
    %v692 = vmul.f32 %v684, %v346
    %v693 = vmul.f32 %v687, %v346
    %v694 = vmul.f32 %v690, %v346
    %v695 = vadd.f32 %v691, 1e-05
    %v696 = vadd.f32 %v692, 1e-05
    %v697 = vadd.f32 %v693, 1e-05
    %v698 = vadd.f32 %v694, 1e-05
    %v699 = vrsqrt.pop %v695
    %v700 = vrsqrt.pop %v696
    %v701 = vrsqrt.pop %v697
    %v702 = vrsqrt.pop %v698
    %v703 = vmul.f32 %v691, %v699
    %v704 = vmul.f32 %v692, %v700
    %v705 = vmul.f32 %v693, %v701
    %v706 = vmul.f32 %v694, %v702
    %v707 = vmul.f32 %v703, %v699
    %v708 = vmul.f32 %v704, %v700
    %v709 = vmul.f32 %v705, %v701
    %v710 = vmul.f32 %v706, %v702
    %v711 = vadd.f32 %v707, %v709
    %v712 = vadd.f32 %v708, %v710
    %v713 = vmul.f32 %v711, %v401
    %v714 = vmul.f32 %v712, %v401
    %v715 = vadd.f32 %v713, 1e-05
    %v716 = vadd.f32 %v714, 1e-05
    %v717 = vrsqrt.pop %v715
    %v718 = vrsqrt.pop %v716
    %v719 = vmul.f32 %v643, %v717
    %v720 = vmul.f32 %v644, %v718
    %v721 = vmul.f32 %v719, %v699
    %v722 = vmul.f32 %v720, %v700
    %v723 = vmul.f32 %v719, %v701
    %v724 = vmul.f32 %v720, %v702
    %726 = vset.pattern.permute.xlu0 0
    %727 = vperm.xlu0 %726, %v721
    %v728 = vpop.permute.xlu0 %727
    %731 = vset.pattern.permute.xlu0 0
    %732 = vperm.xlu0 %731, %v722
    %v733 = vpop.permute.xlu0 %732
    %736 = vset.pattern.permute.xlu0 0
    %737 = vperm.xlu0 %736, %v723
    %v738 = vpop.permute.xlu0 %737
    %741 = vset.pattern.permute.xlu0 0
    %742 = vperm.xlu0 %741, %v724
    %v743 = vpop.permute.xlu0 %742
    %v745 = vmul.f32 %v663, %v728
    %v746 = vmul.f32 %v664, %v728
    %v747 = vmul.f32 %v665, %v733
    %v748 = vmul.f32 %v666, %v733
    %v749 = vmul.f32 %v667, %v738
    %v750 = vmul.f32 %v668, %v738
    %v751 = vmul.f32 %v669, %v743
    %v752 = vmul.f32 %v670, %v743
    %754 = vset.pattern.permute.xlu0 0
    %755 = vperm.xlu0 %754, %v645
    %v756 = vpop.permute.xlu0 %755
    %759 = vset.pattern.permute.xlu0 0
    %760 = vperm.xlu0 %759, %v646
    %v761 = vpop.permute.xlu0 %760
    %v763 = vadd.f32 %v745, %v756
    %v764 = vadd.f32 %v746, %v756
    %v765 = vadd.f32 %v747, %v761
    %v766 = vadd.f32 %v748, %v761
    %v767 = vadd.f32 %v749, %v756
    %v768 = vadd.f32 %v750, %v756
    %v769 = vadd.f32 %v751, %v761
    %v770 = vadd.f32 %v752, %v761
    %v771 = vmax.f32 %v763, 0.0
    %v772 = vmax.f32 %v764, 0.0
    %v773 = vmax.f32 %v765, 0.0
    %v774 = vmax.f32 %v766, 0.0
    %v775 = vmax.f32 %v767, 0.0
    %v776 = vmax.f32 %v768, 0.0
    %v777 = vmax.f32 %v769, 0.0
    %v778 = vmax.f32 %v770, 0.0
    %v779 = vadd.f32 %v771, %v772
    %780 = vadd.xlane.f32.xlu0 %v779
    %v781 = vpop.xlane.xlu0 %780
    %v782 = vadd.f32 %v773, %v774
    %783 = vadd.xlane.f32.xlu0 %v782
    %v784 = vpop.xlane.xlu0 %783
    %v785 = vadd.f32 %v775, %v776
    %786 = vadd.xlane.f32.xlu0 %v785
    %v787 = vpop.xlane.xlu0 %786
    %v788 = vadd.f32 %v777, %v778
    %789 = vadd.xlane.f32.xlu0 %v788
    %v790 = vpop.xlane.xlu0 %789
    %v791 = vmul.f32 %v781, %v346
    %v792 = vmul.f32 %v784, %v346
    %v793 = vmul.f32 %v787, %v346
    %v794 = vmul.f32 %v790, %v346
    %v795 = vld [vmem:[%s9] sm:$0xff]
    %v796 = vld [vmem:[%s9 + $0x8] sm:$0xff]
    %v797 = vld [vmem:[%s10] sm:$0x1]
    %v799 = vlaneseq
    %v800 = vshrl.u32 %v799, 7
    %v801 = vsub.s32 0, %v800
    %v802 = vrot.slane %v797, %v801
    %v808 = vlaneseq
    %v809 = vand.u32 %v808, 127
    %v810 = vlaneseq
    %v811 = vshrl.u32 %v810, 7
    %v812 = vsub.s32 %v809, %v811
    %v813 = vrot.slane %v791, %v812
    %v814 = vadd.s32 %v809, 4294967288
    %v815 = vlaneseq
    %v816 = vshrl.u32 %v815, 7
    %v817 = vsub.s32 %v814, %v816
    %v818 = vrot.slane %v792, %v817
    %vm819 = vcmask 130112
    %v820 = vsel %vm819, %v818, %v813
    %v821 = vlaneseq
    %v822 = vshrl.u32 %v821, 7
    %v823 = vsub.s32 %v809, %v822
    %v824 = vrot.slane %v793, %v823
    %v825 = vlaneseq
    %v826 = vshrl.u32 %v825, 7
    %v827 = vsub.s32 %v814, %v826
    %v828 = vrot.slane %v794, %v827
    %v829 = vsel %vm819, %v828, %v824
    %vm830 = vcmask 1041409
    %v831 = vsel %vm830, %v829, %v820
    %v832 = vsel %vm482, %v831, 0
    %834 = vmatprep.subr.mxu0 0.0
    %835 = vmatpush1.msra.mxu0 %v795
    %836 = vmatprep.subr.mxu0 0.0
    %837 = vmatpush1.msra.mxu0 %v796
    %838 = vmatprep.subr.mxu0 0.0
    %839 = vmatpush1.msra.mxu0 0.0
    %840 = vmatprep.subr.mxu0 0.0
    %841 = vmatpush1.msra.mxu0 0.0
    %842 = vmatprep.subr.mxu0 0.0
    %843 = vmatpush1.msra.mxu0 0.0
    %844 = vmatprep.subr.mxu0 0.0
    %845 = vmatpush1.msra.mxu0 0.0
    %846 = vmatprep.subr.mxu0 0.0
    %847 = vmatpush1.msra.mxu0 0.0
    %848 = vmatprep.subr.mxu0 0.0
    %849 = vmatpush1.msra.mxu0 0.0
    %850 = vmatprep.subr.mxu0 0.0
    %851 = vmatpush1.msra.mxu0 0.0
    %852 = vmatprep.subr.mxu0 0.0
    %853 = vmatpush1.msra.mxu0 0.0
    %854 = vmatprep.subr.mxu0 0.0
    %855 = vmatpush1.msra.mxu0 0.0
    %856 = vmatprep.subr.mxu0 0.0
    %857 = vmatpush1.msra.mxu0 0.0
    %858 = vmatprep.subr.mxu0 0.0
    %859 = vmatpush1.msra.mxu0 0.0
    %860 = vmatprep.subr.mxu0 0.0
    %861 = vmatpush1.msra.mxu0 0.0
    %862 = vmatprep.subr.mxu0 0.0
    %863 = vmatpush1.msra.mxu0 0.0
    %864 = vmatprep.subr.mxu0 0.0
    %865 = vmatpush1.msra.mxu0 0.0
    %866 = vmatprep.subr.mxu0 0.0
    %867 = vmatpush1.msra.mxu0 0.0
    %868 = vmatprep.subr.mxu0 0.0
    %869 = vmatpush1.msra.mxu0 0.0
    %870 = vmatprep.subr.mxu0 0.0
    %871 = vmatpush1.msra.mxu0 0.0
    %872 = vmatprep.subr.mxu0 0.0
    %873 = vmatpush1.msra.mxu0 0.0
    %874 = vmatprep.subr.mxu0 0.0
    %875 = vmatpush1.msra.mxu0 0.0
    %876 = vmatprep.subr.mxu0 0.0
    %877 = vmatpush1.msra.mxu0 0.0
    %878 = vmatprep.subr.mxu0 0.0
    %879 = vmatpush1.msra.mxu0 0.0
    %880 = vmatprep.subr.mxu0 0.0
    %881 = vmatpush1.msra.mxu0 0.0
    %882 = vmatprep.subr.mxu0 0.0
    %883 = vmatpush1.msra.mxu0 0.0
    %884 = vmatprep.subr.mxu0 0.0
    %885 = vmatpush1.msra.mxu0 0.0
    %886 = vmatprep.subr.mxu0 0.0
    %887 = vmatpush1.msra.mxu0 0.0
    %888 = vmatprep.subr.mxu0 0.0
    %889 = vmatpush1.msra.mxu0 0.0
    %890 = vmatprep.subr.mxu0 0.0
    %891 = vmatpush1.msra.mxu0 0.0
    %892 = vmatprep.subr.mxu0 0.0
    %893 = vmatpush1.msra.mxu0 0.0
    %894 = vmatprep.subr.mxu0 0.0
    %895 = vmatpush1.msra.mxu0 0.0
    %896 = vmatprep.subr.mxu0 0.0
    %897 = vmatpush1.msra.mxu0 0.0
    %898 = vmatprep.mubr.f32.mxu0 0.0
    %899 = vmatmul.mubr.f32.gmra.mrb[0].mxu0 %v832
    %v900 = vpop.f32.mrb[0].mxu0
    %v901 = vadd.f32 %v802, %v900
    %v902 = vpop.f32.mrb[0].mxu0
    %903 = vdwg.mxu0
    %vm904 = vcmask 254976
    %v905 = vsel %vm904, %v901, 0.0
    %v906 = vrot.slane %v905, 4
    %v907 = vadd.f32 %v905, %v906
    %v908 = vrot.slane %v907, 2
    %v909 = vadd.f32 %v907, %v908
    %v910 = vrot.slane %v909, 1
    %v911 = vadd.f32 %v909, %v910
    %v912 = vmul.f32 %v911, %v401
    %v913 = vsub.f32 %v901, %v912
    %v914 = vmul.f32 %v913, %v913
    %v915 = vsel %vm904, %v914, 0.0
    %v916 = vrot.slane %v915, 4
    %v917 = vadd.f32 %v915, %v916
    %v918 = vrot.slane %v917, 2
    %v919 = vadd.f32 %v917, %v918
    %v920 = vrot.slane %v919, 1
    %v921 = vadd.f32 %v919, %v920
    %v922 = vmul.f32 %v921, %v401
    %v923 = vadd.f32 %v922, 1e-05
    %v924 = vrsqrt.pop %v923
    %v925 = vmul.f32 %v913, %v924
    %v926 = vld [vmem:[%s11] sm:$0x1]
    %v928 = vlaneseq
    %v929 = vshrl.u32 %v928, 7
    %v930 = vsub.s32 0, %v929
    %v931 = vrot.slane %v926, %v930
    %v933 = vmul.f32 %v925, %v931
    %v934 = vld [vmem:[%s12] sm:$0x1]
    %v936 = vlaneseq
    %v937 = vshrl.u32 %v936, 7
    %v938 = vsub.s32 0, %v937
    %v939 = vrot.slane %v934, %v938
    %v941 = vadd.f32 %v933, %v939
    %v942 = vmax.f32 %v941, 0.0
    %v943 = vld [vmem:[%s13] sm:$0xff]
    %v944 = vld [vmem:[%s13 + $0x8] sm:$0xff]
    %v945 = vld [vmem:[%s13 + $0x10] sm:$0xff]
    %v946 = vld [vmem:[%s13 + $0x18] sm:$0xff]
    %v947 = vld [vmem:[%s14] sm:$0x1]
    %v949 = vlaneseq
    %v950 = vshrl.u32 %v949, 7
    %v951 = vsub.s32 0, %v950
    %v952 = vrot.slane %v947, %v951
    %vm954 = vcmask 261120
    %v956 = vsel %vm954, %v942, 0
    %958 = vmatprep.subr.mxu0 0.0
    %959 = vmatpush1.msra.mxu0 %v943
    %960 = vmatprep.subr.mxu0 0.0
    %961 = vmatpush1.msra.mxu0 %v944
    %962 = vmatprep.subr.mxu0 0.0
    %963 = vmatpush1.msra.mxu0 %v945
    %964 = vmatprep.subr.mxu0 0.0
    %965 = vmatpush1.msra.mxu0 %v946
    %966 = vmatprep.subr.mxu0 0.0
    %967 = vmatpush1.msra.mxu0 0.0
    %968 = vmatprep.subr.mxu0 0.0
    %969 = vmatpush1.msra.mxu0 0.0
    %970 = vmatprep.subr.mxu0 0.0
    %971 = vmatpush1.msra.mxu0 0.0
    %972 = vmatprep.subr.mxu0 0.0
    %973 = vmatpush1.msra.mxu0 0.0
    %974 = vmatprep.subr.mxu0 0.0
    %975 = vmatpush1.msra.mxu0 0.0
    %976 = vmatprep.subr.mxu0 0.0
    %977 = vmatpush1.msra.mxu0 0.0
    %978 = vmatprep.subr.mxu0 0.0
    %979 = vmatpush1.msra.mxu0 0.0
    %980 = vmatprep.subr.mxu0 0.0
    %981 = vmatpush1.msra.mxu0 0.0
    %982 = vmatprep.subr.mxu0 0.0
    %983 = vmatpush1.msra.mxu0 0.0
    %984 = vmatprep.subr.mxu0 0.0
    %985 = vmatpush1.msra.mxu0 0.0
    %986 = vmatprep.subr.mxu0 0.0
    %987 = vmatpush1.msra.mxu0 0.0
    %988 = vmatprep.subr.mxu0 0.0
    %989 = vmatpush1.msra.mxu0 0.0
    %990 = vmatprep.subr.mxu0 0.0
    %991 = vmatpush1.msra.mxu0 0.0
    %992 = vmatprep.subr.mxu0 0.0
    %993 = vmatpush1.msra.mxu0 0.0
    %994 = vmatprep.subr.mxu0 0.0
    %995 = vmatpush1.msra.mxu0 0.0
    %996 = vmatprep.subr.mxu0 0.0
    %997 = vmatpush1.msra.mxu0 0.0
    %998 = vmatprep.subr.mxu0 0.0
    %999 = vmatpush1.msra.mxu0 0.0
    %1000 = vmatprep.subr.mxu0 0.0
    %1001 = vmatpush1.msra.mxu0 0.0
    %1002 = vmatprep.subr.mxu0 0.0
    %1003 = vmatpush1.msra.mxu0 0.0
    %1004 = vmatprep.subr.mxu0 0.0
    %1005 = vmatpush1.msra.mxu0 0.0
    %1006 = vmatprep.subr.mxu0 0.0
    %1007 = vmatpush1.msra.mxu0 0.0
    %1008 = vmatprep.subr.mxu0 0.0
    %1009 = vmatpush1.msra.mxu0 0.0
    %1010 = vmatprep.subr.mxu0 0.0
    %1011 = vmatpush1.msra.mxu0 0.0
    %1012 = vmatprep.subr.mxu0 0.0
    %1013 = vmatpush1.msra.mxu0 0.0
    %1014 = vmatprep.subr.mxu0 0.0
    %1015 = vmatpush1.msra.mxu0 0.0
    %1016 = vmatprep.subr.mxu0 0.0
    %1017 = vmatpush1.msra.mxu0 0.0
    %1018 = vmatprep.subr.mxu0 0.0
    %1019 = vmatpush1.msra.mxu0 0.0
    %1020 = vmatprep.subr.mxu0 0.0
    %1021 = vmatpush1.msra.mxu0 0.0
    %1022 = vmatprep.mubr.f32.mxu0 0.0
    %1023 = vmatmul.mubr.f32.gmra.mrb[0].mxu0 %v956
    %v1024 = vpop.f32.mrb[0].mxu0
    %v1025 = vadd.f32 %v952, %v1024
    %v1026 = vpop.f32.mrb[0].mxu0
    %1027 = vdwg.mxu0
    %v1028 = vxor.u32 %v1025, 2147483648
    %v1029 = vmul.f32 %v1028, 1.442695
    %v1030 = vpow.pop %v1029
    %v1031 = vadd.f32 %v1030, 1.0
    %v1032 = vrcp.pop %v1031
    %v1033 = vmul.f32 1.0, %v1032
    %v1034 = vlaneseq
    %v1035 = vshrl.u32 %v1034, 7
    %v1036 = vsub.s32 0, %v1035
    %v1037 = vrot.slane %v1033, %v1036
    %1039 = vbcast.lane.b32.xlu0 %v1037, 256
    %v1040 = vpop.permute.xlu0 %1039
    %s1042 = sor.u32 256, 8
    %1043 = vbcast.lane.b32.xlu0 %v1037, %s1042
    %v1044 = vpop.permute.xlu0 %1043
    %v1045 = vlaneseq
    %v1046 = vshrl.u32 %v1045, 7
    %v1047 = vsub.s32 1, %v1046
    %v1048 = vrot.slane %v1033, %v1047
    %1050 = vbcast.lane.b32.xlu0 %v1048, 256
    %v1051 = vpop.permute.xlu0 %1050
    %s1053 = sor.u32 256, 8
    %1054 = vbcast.lane.b32.xlu0 %v1048, %s1053
    %v1055 = vpop.permute.xlu0 %1054
    %v1056 = vmul.f32 %v1040, %v771
    %v1057 = vmul.f32 %v1040, %v772
    %v1058 = vmul.f32 %v1044, %v773
    %v1059 = vmul.f32 %v1044, %v774
    %v1060 = vmul.f32 %v1051, %v775
    %v1061 = vmul.f32 %v1051, %v776
    %v1062 = vmul.f32 %v1055, %v777
    %v1063 = vmul.f32 %v1055, %v778
    %v1064 = vld [vmem:[%s15] sm:$0xff]
    %v1065 = vld [vmem:[%s15 + $0x8] sm:$0xff]
    %v1066 = vld [vmem:[%s15 + $0x10] sm:$0xff]
    %v1067 = vld [vmem:[%s15 + $0x18] sm:$0xff]
    %v1068 = vld [vmem:[%s16] sm:$0xff]
    %v1069 = vld [vmem:[%s16 + $0x8] sm:$0xff]
    %v1070 = vld [vmem:[%s16 + $0x10] sm:$0xff]
    %v1071 = vld [vmem:[%s16 + $0x18] sm:$0xff]
    %1073 = vset.pattern.permute.xlu0 0
    %1074 = vperm.xlu0 %1073, %v1068
    %v1075 = vpop.permute.xlu0 %1074
    %1078 = vset.pattern.permute.xlu0 0
    %1079 = vperm.xlu0 %1078, %v1069
    %v1080 = vpop.permute.xlu0 %1079
    %1083 = vset.pattern.permute.xlu0 0
    %1084 = vperm.xlu0 %1083, %v1070
    %v1085 = vpop.permute.xlu0 %1084
    %1088 = vset.pattern.permute.xlu0 0
    %1089 = vperm.xlu0 %1088, %v1071
    %v1090 = vpop.permute.xlu0 %1089
    %v1093 = vsel %vm482, %v1064, 0
    %v1096 = vsel %vm482, %v1065, 0
    %v1099 = vsel %vm482, %v1066, 0
    %v1102 = vsel %vm482, %v1067, 0
    %1104 = vmatprep.subr.mxu0 %v1057
    %1105 = vmatpush1.msra.mxu0 %v1056
    %1106 = vmatprep.subr.mxu0 %v1059
    %1107 = vmatpush1.msra.mxu0 %v1058
    %1108 = vmatprep.subr.mxu0 0.0
    %1109 = vmatpush1.msra.mxu0 0.0
    %1110 = vmatprep.subr.mxu0 0.0
    %1111 = vmatpush1.msra.mxu0 0.0
    %1112 = vmatprep.subr.mxu0 0.0
    %1113 = vmatpush1.msra.mxu0 0.0
    %1114 = vmatprep.subr.mxu0 0.0
    %1115 = vmatpush1.msra.mxu0 0.0
    %1116 = vmatprep.subr.mxu0 0.0
    %1117 = vmatpush1.msra.mxu0 0.0
    %1118 = vmatprep.subr.mxu0 0.0
    %1119 = vmatpush1.msra.mxu0 0.0
    %1120 = vmatprep.subr.mxu0 0.0
    %1121 = vmatpush1.msra.mxu0 0.0
    %1122 = vmatprep.subr.mxu0 0.0
    %1123 = vmatpush1.msra.mxu0 0.0
    %1124 = vmatprep.subr.mxu0 0.0
    %1125 = vmatpush1.msra.mxu0 0.0
    %1126 = vmatprep.subr.mxu0 0.0
    %1127 = vmatpush1.msra.mxu0 0.0
    %1128 = vmatprep.subr.mxu0 0.0
    %1129 = vmatpush1.msra.mxu0 0.0
    %1130 = vmatprep.subr.mxu0 0.0
    %1131 = vmatpush1.msra.mxu0 0.0
    %1132 = vmatprep.subr.mxu0 0.0
    %1133 = vmatpush1.msra.mxu0 0.0
    %1134 = vmatprep.subr.mxu0 0.0
    %1135 = vmatpush1.msra.mxu0 0.0
    %1136 = vmatprep.subr.mxu0 0.0
    %1137 = vmatpush1.msra.mxu0 0.0
    %1138 = vmatprep.subr.mxu0 0.0
    %1139 = vmatpush1.msra.mxu0 0.0
    %1140 = vmatprep.subr.mxu0 0.0
    %1141 = vmatpush1.msra.mxu0 0.0
    %1142 = vmatprep.subr.mxu0 0.0
    %1143 = vmatpush1.msra.mxu0 0.0
    %1144 = vmatprep.subr.mxu0 0.0
    %1145 = vmatpush1.msra.mxu0 0.0
    %1146 = vmatprep.subr.mxu0 0.0
    %1147 = vmatpush1.msra.mxu0 0.0
    %1148 = vmatprep.subr.mxu0 0.0
    %1149 = vmatpush1.msra.mxu0 0.0
    %1150 = vmatprep.subr.mxu0 0.0
    %1151 = vmatpush1.msra.mxu0 0.0
    %1152 = vmatprep.subr.mxu0 0.0
    %1153 = vmatpush1.msra.mxu0 0.0
    %1154 = vmatprep.subr.mxu0 0.0
    %1155 = vmatpush1.msra.mxu0 0.0
    %1156 = vmatprep.subr.mxu0 0.0
    %1157 = vmatpush1.msra.mxu0 0.0
    %1158 = vmatprep.subr.mxu0 0.0
    %1159 = vmatpush1.msra.mxu0 0.0
    %1160 = vmatprep.subr.mxu0 0.0
    %1161 = vmatpush1.msra.mxu0 0.0
    %1162 = vmatprep.subr.mxu0 0.0
    %1163 = vmatpush1.msra.mxu0 0.0
    %1164 = vmatprep.subr.mxu0 0.0
    %1165 = vmatpush1.msra.mxu0 0.0
    %1166 = vmatprep.subr.mxu0 0.0
    %1167 = vmatpush1.msra.mxu0 0.0
    %1168 = vmatprep.mubr.f32.mxu0 0.0
    %1169 = vmatmul.mubr.f32.gmra.mrb[0].mxu0 %v1093
    %v1170 = vpop.f32.mrb[0].mxu0
    %v1171 = vadd.f32 %v1075, %v1170
    %v1172 = vpop.f32.mrb[0].mxu0
    %v1173 = vadd.f32 %v1075, %v1172
    %1174 = vmatprep.mubr.f32.mxu0 0.0
    %1175 = vmatmul.mubr.f32.gmra.mrb[0].mxu0 %v1096
    %v1176 = vpop.f32.mrb[0].mxu0
    %v1177 = vadd.f32 %v1080, %v1176
    %v1178 = vpop.f32.mrb[0].mxu0
    %v1179 = vadd.f32 %v1080, %v1178
    %1180 = vmatprep.mubr.f32.mxu0 0.0
    %1181 = vmatmul.mubr.f32.gmra.mrb[0].mxu0 %v1099
    %v1182 = vpop.f32.mrb[0].mxu0
    %v1183 = vadd.f32 %v1085, %v1182
    %v1184 = vpop.f32.mrb[0].mxu0
    %v1185 = vadd.f32 %v1085, %v1184
    %1186 = vmatprep.mubr.f32.mxu0 0.0
    %1187 = vmatmul.mubr.f32.gmra.mrb[0].mxu0 %v1102
    %v1188 = vpop.f32.mrb[0].mxu0
    %v1189 = vadd.f32 %v1090, %v1188
    %v1190 = vpop.f32.mrb[0].mxu0
    %v1191 = vadd.f32 %v1090, %v1190
    %1192 = vdwg.mxu0
    %1193 = vmatprep.subr.mxu0 %v1061
    %1194 = vmatpush1.msra.mxu0 %v1060
    %1195 = vmatprep.subr.mxu0 %v1063
    %1196 = vmatpush1.msra.mxu0 %v1062
    %1197 = vmatprep.subr.mxu0 0.0
    %1198 = vmatpush1.msra.mxu0 0.0
    %1199 = vmatprep.subr.mxu0 0.0
    %1200 = vmatpush1.msra.mxu0 0.0
    %1201 = vmatprep.subr.mxu0 0.0
    %1202 = vmatpush1.msra.mxu0 0.0
    %1203 = vmatprep.subr.mxu0 0.0
    %1204 = vmatpush1.msra.mxu0 0.0
    %1205 = vmatprep.subr.mxu0 0.0
    %1206 = vmatpush1.msra.mxu0 0.0
    %1207 = vmatprep.subr.mxu0 0.0
    %1208 = vmatpush1.msra.mxu0 0.0
    %1209 = vmatprep.subr.mxu0 0.0
    %1210 = vmatpush1.msra.mxu0 0.0
    %1211 = vmatprep.subr.mxu0 0.0
    %1212 = vmatpush1.msra.mxu0 0.0
    %1213 = vmatprep.subr.mxu0 0.0
    %1214 = vmatpush1.msra.mxu0 0.0
    %1215 = vmatprep.subr.mxu0 0.0
    %1216 = vmatpush1.msra.mxu0 0.0
    %1217 = vmatprep.subr.mxu0 0.0
    %1218 = vmatpush1.msra.mxu0 0.0
    %1219 = vmatprep.subr.mxu0 0.0
    %1220 = vmatpush1.msra.mxu0 0.0
    %1221 = vmatprep.subr.mxu0 0.0
    %1222 = vmatpush1.msra.mxu0 0.0
    %1223 = vmatprep.subr.mxu0 0.0
    %1224 = vmatpush1.msra.mxu0 0.0
    %1225 = vmatprep.subr.mxu0 0.0
    %1226 = vmatpush1.msra.mxu0 0.0
    %1227 = vmatprep.subr.mxu0 0.0
    %1228 = vmatpush1.msra.mxu0 0.0
    %1229 = vmatprep.subr.mxu0 0.0
    %1230 = vmatpush1.msra.mxu0 0.0
    %1231 = vmatprep.subr.mxu0 0.0
    %1232 = vmatpush1.msra.mxu0 0.0
    %1233 = vmatprep.subr.mxu0 0.0
    %1234 = vmatpush1.msra.mxu0 0.0
    %1235 = vmatprep.subr.mxu0 0.0
    %1236 = vmatpush1.msra.mxu0 0.0
    %1237 = vmatprep.subr.mxu0 0.0
    %1238 = vmatpush1.msra.mxu0 0.0
    %1239 = vmatprep.subr.mxu0 0.0
    %1240 = vmatpush1.msra.mxu0 0.0
    %1241 = vmatprep.subr.mxu0 0.0
    %1242 = vmatpush1.msra.mxu0 0.0
    %1243 = vmatprep.subr.mxu0 0.0
    %1244 = vmatpush1.msra.mxu0 0.0
    %1245 = vmatprep.subr.mxu0 0.0
    %1246 = vmatpush1.msra.mxu0 0.0
    %1247 = vmatprep.subr.mxu0 0.0
    %1248 = vmatpush1.msra.mxu0 0.0
    %1249 = vmatprep.subr.mxu0 0.0
    %1250 = vmatpush1.msra.mxu0 0.0
    %1251 = vmatprep.subr.mxu0 0.0
    %1252 = vmatpush1.msra.mxu0 0.0
    %1253 = vmatprep.subr.mxu0 0.0
    %1254 = vmatpush1.msra.mxu0 0.0
    %1255 = vmatprep.subr.mxu0 0.0
    %1256 = vmatpush1.msra.mxu0 0.0
    %1257 = vmatprep.mubr.f32.mxu0 0.0
    %1258 = vmatmul.mubr.f32.gmra.mrb[0].mxu0 %v1093
    %v1259 = vpop.f32.mrb[0].mxu0
    %v1260 = vadd.f32 %v1075, %v1259
    %v1261 = vpop.f32.mrb[0].mxu0
    %v1262 = vadd.f32 %v1075, %v1261
    %1263 = vmatprep.mubr.f32.mxu0 0.0
    %1264 = vmatmul.mubr.f32.gmra.mrb[0].mxu0 %v1096
    %v1265 = vpop.f32.mrb[0].mxu0
    %v1266 = vadd.f32 %v1080, %v1265
    %v1267 = vpop.f32.mrb[0].mxu0
    %v1268 = vadd.f32 %v1080, %v1267
    %1269 = vmatprep.mubr.f32.mxu0 0.0
    %1270 = vmatmul.mubr.f32.gmra.mrb[0].mxu0 %v1099
    %v1271 = vpop.f32.mrb[0].mxu0
    %v1272 = vadd.f32 %v1085, %v1271
    %v1273 = vpop.f32.mrb[0].mxu0
    %v1274 = vadd.f32 %v1085, %v1273
    %1275 = vmatprep.mubr.f32.mxu0 0.0
    %1276 = vmatmul.mubr.f32.gmra.mrb[0].mxu0 %v1102
    %v1277 = vpop.f32.mrb[0].mxu0
    %v1278 = vadd.f32 %v1090, %v1277
    %v1279 = vpop.f32.mrb[0].mxu0
    %v1280 = vadd.f32 %v1090, %v1279
    %1281 = vdwg.mxu0
    %v1282 = vld [vmem:[%s17] sm:$0xff]
    %v1283 = vld [vmem:[%s17 + $0x8] sm:$0xff]
    %v1284 = vld [vmem:[%s17 + $0x10] sm:$0xff]
    %v1285 = vld [vmem:[%s17 + $0x18] sm:$0xff]
    %v1286 = vld [vmem:[%s18] sm:$0xff]
    %v1287 = vld [vmem:[%s18 + $0x8] sm:$0xff]
    %v1288 = vld [vmem:[%s18 + $0x10] sm:$0xff]
    %v1289 = vld [vmem:[%s18 + $0x18] sm:$0xff]
    %v1290 = vadd.f32 %v1171, %v1173
    %1291 = vadd.xlane.f32.xlu0 %v1290
    %v1292 = vpop.xlane.xlu0 %1291
    %v1293 = vadd.f32 %v1177, %v1179
    %1294 = vadd.xlane.f32.xlu0 %v1293
    %v1295 = vpop.xlane.xlu0 %1294
    %v1296 = vadd.f32 %v1183, %v1185
    %1297 = vadd.xlane.f32.xlu0 %v1296
    %v1298 = vpop.xlane.xlu0 %1297
    %v1299 = vadd.f32 %v1189, %v1191
    %1300 = vadd.xlane.f32.xlu0 %v1299
    %v1301 = vpop.xlane.xlu0 %1300
    %v1302 = vadd.f32 %v1260, %v1262
    %1303 = vadd.xlane.f32.xlu0 %v1302
    %v1304 = vpop.xlane.xlu0 %1303
    %v1305 = vadd.f32 %v1266, %v1268
    %1306 = vadd.xlane.f32.xlu0 %v1305
    %v1307 = vpop.xlane.xlu0 %1306
    %v1308 = vadd.f32 %v1272, %v1274
    %1309 = vadd.xlane.f32.xlu0 %v1308
    %v1310 = vpop.xlane.xlu0 %1309
    %v1311 = vadd.f32 %v1278, %v1280
    %1312 = vadd.xlane.f32.xlu0 %v1311
    %v1313 = vpop.xlane.xlu0 %1312
    %v1314 = vmul.f32 %v1292, %v346
    %v1315 = vmul.f32 %v1295, %v346
    %v1316 = vmul.f32 %v1298, %v346
    %v1317 = vmul.f32 %v1301, %v346
    %v1318 = vmul.f32 %v1304, %v346
    %v1319 = vmul.f32 %v1307, %v346
    %v1320 = vmul.f32 %v1310, %v346
    %v1321 = vmul.f32 %v1313, %v346
    %v1322 = vsub.f32 %v1171, %v1314
    %v1323 = vsub.f32 %v1173, %v1314
    %v1324 = vsub.f32 %v1177, %v1315
    %v1325 = vsub.f32 %v1179, %v1315
    %v1326 = vsub.f32 %v1183, %v1316
    %v1327 = vsub.f32 %v1185, %v1316
    %v1328 = vsub.f32 %v1189, %v1317
    %v1329 = vsub.f32 %v1191, %v1317
    %v1330 = vsub.f32 %v1260, %v1318
    %v1331 = vsub.f32 %v1262, %v1318
    %v1332 = vsub.f32 %v1266, %v1319
    %v1333 = vsub.f32 %v1268, %v1319
    %v1334 = vsub.f32 %v1272, %v1320
    %v1335 = vsub.f32 %v1274, %v1320
    %v1336 = vsub.f32 %v1278, %v1321
    %v1337 = vsub.f32 %v1280, %v1321
    %v1338 = vmul.f32 %v1322, %v1322
    %v1339 = vmul.f32 %v1323, %v1323
    %v1340 = vmul.f32 %v1324, %v1324
    %v1341 = vmul.f32 %v1325, %v1325
    %v1342 = vmul.f32 %v1326, %v1326
    %v1343 = vmul.f32 %v1327, %v1327
    %v1344 = vmul.f32 %v1328, %v1328
    %v1345 = vmul.f32 %v1329, %v1329
    %v1346 = vmul.f32 %v1330, %v1330
    %v1347 = vmul.f32 %v1331, %v1331
    %v1348 = vmul.f32 %v1332, %v1332
    %v1349 = vmul.f32 %v1333, %v1333
    %v1350 = vmul.f32 %v1334, %v1334
    %v1351 = vmul.f32 %v1335, %v1335
    %v1352 = vmul.f32 %v1336, %v1336
    %v1353 = vmul.f32 %v1337, %v1337
    %v1354 = vadd.f32 %v1338, %v1339
    %1355 = vadd.xlane.f32.xlu0 %v1354
    %v1356 = vpop.xlane.xlu0 %1355
    %v1357 = vadd.f32 %v1340, %v1341
    %1358 = vadd.xlane.f32.xlu0 %v1357
    %v1359 = vpop.xlane.xlu0 %1358
    %v1360 = vadd.f32 %v1342, %v1343
    %1361 = vadd.xlane.f32.xlu0 %v1360
    %v1362 = vpop.xlane.xlu0 %1361
    %v1363 = vadd.f32 %v1344, %v1345
    %1364 = vadd.xlane.f32.xlu0 %v1363
    %v1365 = vpop.xlane.xlu0 %1364
    %v1366 = vadd.f32 %v1346, %v1347
    %1367 = vadd.xlane.f32.xlu0 %v1366
    %v1368 = vpop.xlane.xlu0 %1367
    %v1369 = vadd.f32 %v1348, %v1349
    %1370 = vadd.xlane.f32.xlu0 %v1369
    %v1371 = vpop.xlane.xlu0 %1370
    %v1372 = vadd.f32 %v1350, %v1351
    %1373 = vadd.xlane.f32.xlu0 %v1372
    %v1374 = vpop.xlane.xlu0 %1373
    %v1375 = vadd.f32 %v1352, %v1353
    %1376 = vadd.xlane.f32.xlu0 %v1375
    %v1377 = vpop.xlane.xlu0 %1376
    %v1378 = vmul.f32 %v1356, %v346
    %v1379 = vmul.f32 %v1359, %v346
    %v1380 = vmul.f32 %v1362, %v346
    %v1381 = vmul.f32 %v1365, %v346
    %v1382 = vmul.f32 %v1368, %v346
    %v1383 = vmul.f32 %v1371, %v346
    %v1384 = vmul.f32 %v1374, %v346
    %v1385 = vmul.f32 %v1377, %v346
    %v1386 = vadd.f32 %v1378, 1e-05
    %v1387 = vadd.f32 %v1379, 1e-05
    %v1388 = vadd.f32 %v1380, 1e-05
    %v1389 = vadd.f32 %v1381, 1e-05
    %v1390 = vadd.f32 %v1382, 1e-05
    %v1391 = vadd.f32 %v1383, 1e-05
    %v1392 = vadd.f32 %v1384, 1e-05
    %v1393 = vadd.f32 %v1385, 1e-05
    %v1394 = vrsqrt.pop %v1386
    %v1395 = vrsqrt.pop %v1387
    %v1396 = vrsqrt.pop %v1388
    %v1397 = vrsqrt.pop %v1389
    %v1398 = vrsqrt.pop %v1390
    %v1399 = vrsqrt.pop %v1391
    %v1400 = vrsqrt.pop %v1392
    %v1401 = vrsqrt.pop %v1393
    %v1402 = vmul.f32 %v1378, %v1394
    %v1403 = vmul.f32 %v1379, %v1395
    %v1404 = vmul.f32 %v1380, %v1396
    %v1405 = vmul.f32 %v1381, %v1397
    %v1406 = vmul.f32 %v1382, %v1398
    %v1407 = vmul.f32 %v1383, %v1399
    %v1408 = vmul.f32 %v1384, %v1400
    %v1409 = vmul.f32 %v1385, %v1401
    %v1410 = vmul.f32 %v1402, %v1394
    %v1411 = vmul.f32 %v1403, %v1395
    %v1412 = vmul.f32 %v1404, %v1396
    %v1413 = vmul.f32 %v1405, %v1397
    %v1414 = vmul.f32 %v1406, %v1398
    %v1415 = vmul.f32 %v1407, %v1399
    %v1416 = vmul.f32 %v1408, %v1400
    %v1417 = vmul.f32 %v1409, %v1401
    %v1418 = vadd.f32 %v1410, %v1414
    %v1419 = vadd.f32 %v1411, %v1415
    %v1420 = vadd.f32 %v1412, %v1416
    %v1421 = vadd.f32 %v1413, %v1417
    %v1422 = vmul.f32 %v1418, %v401
    %v1423 = vmul.f32 %v1419, %v401
    %v1424 = vmul.f32 %v1420, %v401
    %v1425 = vmul.f32 %v1421, %v401
    %v1426 = vadd.f32 %v1422, 1e-05
    %v1427 = vadd.f32 %v1423, 1e-05
    %v1428 = vadd.f32 %v1424, 1e-05
    %v1429 = vadd.f32 %v1425, 1e-05
    %v1430 = vrsqrt.pop %v1426
    %v1431 = vrsqrt.pop %v1427
    %v1432 = vrsqrt.pop %v1428
    %v1433 = vrsqrt.pop %v1429
    %v1434 = vmul.f32 %v1282, %v1430
    %v1435 = vmul.f32 %v1283, %v1431
    %v1436 = vmul.f32 %v1284, %v1432
    %v1437 = vmul.f32 %v1285, %v1433
    %v1438 = vmul.f32 %v1434, %v1394
    %v1439 = vmul.f32 %v1435, %v1395
    %v1440 = vmul.f32 %v1436, %v1396
    %v1441 = vmul.f32 %v1437, %v1397
    %v1442 = vmul.f32 %v1434, %v1398
    %v1443 = vmul.f32 %v1435, %v1399
    %v1444 = vmul.f32 %v1436, %v1400
    %v1445 = vmul.f32 %v1437, %v1401
    %1447 = vset.pattern.permute.xlu0 0
    %1448 = vperm.xlu0 %1447, %v1438
    %v1449 = vpop.permute.xlu0 %1448
    %1452 = vset.pattern.permute.xlu0 0
    %1453 = vperm.xlu0 %1452, %v1439
    %v1454 = vpop.permute.xlu0 %1453
    %1457 = vset.pattern.permute.xlu0 0
    %1458 = vperm.xlu0 %1457, %v1440
    %v1459 = vpop.permute.xlu0 %1458
    %1462 = vset.pattern.permute.xlu0 0
    %1463 = vperm.xlu0 %1462, %v1441
    %v1464 = vpop.permute.xlu0 %1463
    %1467 = vset.pattern.permute.xlu0 0
    %1468 = vperm.xlu0 %1467, %v1442
    %v1469 = vpop.permute.xlu0 %1468
    %1472 = vset.pattern.permute.xlu0 0
    %1473 = vperm.xlu0 %1472, %v1443
    %v1474 = vpop.permute.xlu0 %1473
    %1477 = vset.pattern.permute.xlu0 0
    %1478 = vperm.xlu0 %1477, %v1444
    %v1479 = vpop.permute.xlu0 %1478
    %1482 = vset.pattern.permute.xlu0 0
    %1483 = vperm.xlu0 %1482, %v1445
    %v1484 = vpop.permute.xlu0 %1483
    %v1486 = vmul.f32 %v1322, %v1449
    %v1487 = vmul.f32 %v1323, %v1449
    %v1488 = vmul.f32 %v1324, %v1454
    %v1489 = vmul.f32 %v1325, %v1454
    %v1490 = vmul.f32 %v1326, %v1459
    %v1491 = vmul.f32 %v1327, %v1459
    %v1492 = vmul.f32 %v1328, %v1464
    %v1493 = vmul.f32 %v1329, %v1464
    %v1494 = vmul.f32 %v1330, %v1469
    %v1495 = vmul.f32 %v1331, %v1469
    %v1496 = vmul.f32 %v1332, %v1474
    %v1497 = vmul.f32 %v1333, %v1474
    %v1498 = vmul.f32 %v1334, %v1479
    %v1499 = vmul.f32 %v1335, %v1479
    %v1500 = vmul.f32 %v1336, %v1484
    %v1501 = vmul.f32 %v1337, %v1484
    %1503 = vset.pattern.permute.xlu0 0
    %1504 = vperm.xlu0 %1503, %v1286
    %v1505 = vpop.permute.xlu0 %1504
    %1508 = vset.pattern.permute.xlu0 0
    %1509 = vperm.xlu0 %1508, %v1287
    %v1510 = vpop.permute.xlu0 %1509
    %1513 = vset.pattern.permute.xlu0 0
    %1514 = vperm.xlu0 %1513, %v1288
    %v1515 = vpop.permute.xlu0 %1514
    %1518 = vset.pattern.permute.xlu0 0
    %1519 = vperm.xlu0 %1518, %v1289
    %v1520 = vpop.permute.xlu0 %1519
    %v1522 = vadd.f32 %v1486, %v1505
    %v1523 = vadd.f32 %v1487, %v1505
    %v1524 = vadd.f32 %v1488, %v1510
    %v1525 = vadd.f32 %v1489, %v1510
    %v1526 = vadd.f32 %v1490, %v1515
    %v1527 = vadd.f32 %v1491, %v1515
    %v1528 = vadd.f32 %v1492, %v1520
    %v1529 = vadd.f32 %v1493, %v1520
    %v1530 = vadd.f32 %v1494, %v1505
    %v1531 = vadd.f32 %v1495, %v1505
    %v1532 = vadd.f32 %v1496, %v1510
    %v1533 = vadd.f32 %v1497, %v1510
    %v1534 = vadd.f32 %v1498, %v1515
    %v1535 = vadd.f32 %v1499, %v1515
    %v1536 = vadd.f32 %v1500, %v1520
    %v1537 = vadd.f32 %v1501, %v1520
    %v1538 = vadd.f32 %v1522, %v207
    %v1539 = vadd.f32 %v1523, %v209
    %v1540 = vadd.f32 %v1524, %v213
    %v1541 = vadd.f32 %v1525, %v215
    %v1542 = vadd.f32 %v1526, %v219
    %v1543 = vadd.f32 %v1527, %v221
    %v1544 = vadd.f32 %v1528, %v225
    %v1545 = vadd.f32 %v1529, %v227
    %v1546 = vadd.f32 %v1530, %v308
    %v1547 = vadd.f32 %v1531, %v310
    %v1548 = vadd.f32 %v1532, %v314
    %v1549 = vadd.f32 %v1533, %v316
    %v1550 = vadd.f32 %v1534, %v320
    %v1551 = vadd.f32 %v1535, %v322
    %v1552 = vadd.f32 %v1536, %v326
    %v1553 = vadd.f32 %v1537, %v328
    %v1554 = vmax.f32 %v1538, 0.0
    %v1555 = vmax.f32 %v1539, 0.0
    %v1556 = vmax.f32 %v1540, 0.0
    %v1557 = vmax.f32 %v1541, 0.0
    %v1558 = vmax.f32 %v1542, 0.0
    %v1559 = vmax.f32 %v1543, 0.0
    %v1560 = vmax.f32 %v1544, 0.0
    %v1561 = vmax.f32 %v1545, 0.0
    %v1562 = vmax.f32 %v1546, 0.0
    %v1563 = vmax.f32 %v1547, 0.0
    %v1564 = vmax.f32 %v1548, 0.0
    %v1565 = vmax.f32 %v1549, 0.0
    %v1566 = vmax.f32 %v1550, 0.0
    %v1567 = vmax.f32 %v1551, 0.0
    %v1568 = vmax.f32 %v1552, 0.0
    %v1569 = vmax.f32 %v1553, 0.0
    %1570 = vst [vmem:[#allocation2] sm:$0xff] %v1554
    %1571 = vst [vmem:[#allocation2 + $0x8] sm:$0xff] %v1555
    %1572 = vst [vmem:[#allocation2 + $0x10] sm:$0xff] %v1556
    %1573 = vst [vmem:[#allocation2 + $0x18] sm:$0xff] %v1557
    %1574 = vst [vmem:[#allocation2 + $0x20] sm:$0xff] %v1558
    %1575 = vst [vmem:[#allocation2 + $0x28] sm:$0xff] %v1559
    %1576 = vst [vmem:[#allocation2 + $0x30] sm:$0xff] %v1560
    %1577 = vst [vmem:[#allocation2 + $0x38] sm:$0xff] %v1561
    %1578 = vst [vmem:[#allocation2 + $0x40] sm:$0xff] %v1562
    %1579 = vst [vmem:[#allocation2 + $0x48] sm:$0xff] %v1563
    %1580 = vst [vmem:[#allocation2 + $0x50] sm:$0xff] %v1564
    %1581 = vst [vmem:[#allocation2 + $0x58] sm:$0xff] %v1565
    %1582 = vst [vmem:[#allocation2 + $0x60] sm:$0xff] %v1566
    %1583 = vst [vmem:[#allocation2 + $0x68] sm:$0xff] %v1567
    %1584 = vst [vmem:[#allocation2 + $0x70] sm:$0xff] %v1568
    %1585 = vst [vmem:[#allocation2 + $0x78] sm:$0xff] %v1569
    // Predicated region
    $region78: #{tpu_custom_call.1} parent=1 // pred_check
      _
    $region79: #{tpu_custom_call.1} parent=1 // pred_check_branch
      %1587 = sbr.rel (0) target = $region81
    $region80: #{tpu_custom_call.1} parent=1 // pred_region
      %s1589 = ssub.s32 2048, 2048
      %1590 = vsyncadd [#allocation3], %s1589
      %s1591 = sshll.u32 [#allocation2], 4
      %s1592 = int_to_ptr.vmem [resolvable:$true] %s1591
      %1597 = dma.vmem_to_hbm [thread:$0]  %s1592, 2048, %s19, [#allocation3], 256, 256, 16
    $region81: #{tpu_custom_call.1} parent=1 // pred_fallthru
      _
    // Predicated region
    $region82: #{tpu_custom_call.1} parent=1 // pred_check
      _
    $region83: #{tpu_custom_call.1} parent=1 // pred_check_branch
      %1599 = sbr.rel (0) target = $region85
    $region84: #{tpu_custom_call.1} parent=1 // pred_region
      %1600 = dma.done [#allocation3], 2048
    $region85: #{tpu_custom_call.1} parent=1 // pred_fallthru
      _
    %1601 = vsyncpa [#allocation3], 1

</llo_original>
